<compile_context>
chip_gen: v6e
topology: v6e:2x2x1
jax: 0.10.0
libtpu: 0.0.40
codegen_flags: <defaults>
</compile_context>

<pallas_src>
import jax
import jax.numpy as jnp
from jax.experimental import pallas as pl
from jax.experimental.pallas import tpu as pltpu

H1, H2 = 256, 512  # hidden widths of MLP([latent, 256, 512])


def _round_up(x, m):
    return ((x + m - 1) // m) * m


def _vmem_capacity_bytes():
    try:
        return int(pltpu.get_tpu_info().vmem_capacity_bytes)
    except Exception:
        return 64 << 20  # conservative default (v7x per-TC physical VMEM)


def _footprint_bytes(block_b, block_n, latent_pad, n_tiled, single_buffer_weights):
    """Rough per-generation VMEM footprint estimate for the chosen tiles."""
    wbuf = 1 if single_buffer_weights else 2
    # resident layer-1/2 weights + biases (constant block index)
    resident = wbuf * (latent_pad * H1 * 2 + H1 * 4 + H1 * H2 * 2 + H2 * 4)
    z_tile = 2 * block_b * latent_pad * 2                      # bf16, double-buffered
    w3_bufs = 2 if n_tiled else wbuf
    w3_tile = w3_bufs * (H2 * block_n * 2 + block_n * 4)       # w3 bf16 + b3 f32
    out_tile = 2 * block_b * block_n * 4                       # f32 out, double-buffered
    h_scratch = block_b * H2 * 2                               # bf16 fc1 cache
    intermediates = block_b * (H1 + H2) * 4                    # live f32 intermediates
    return resident + z_tile + w3_tile + out_tile + h_scratch + intermediates


def decoder_kernel(z_ref, w1_ref, b1_ref, w2_ref, b2_ref, w3_ref, b3_ref, out_ref, h_ref):
    # fc1 (Linear+ReLU, Linear+ReLU): compute once per batch tile, cache bf16 result in VMEM.
    @pl.when(pl.program_id(1) == 0)
    def _():
        h = jnp.dot(z_ref[...], w1_ref[...], preferred_element_type=jnp.float32)
        h = jnp.maximum(h + b1_ref[...], 0.0)
        h = jnp.dot(h.astype(jnp.bfloat16), w2_ref[...], preferred_element_type=jnp.float32)
        h = jnp.maximum(h + b2_ref[...], 0.0)
        h_ref[...] = h.astype(jnp.bfloat16)

    # fc2: Linear(512, block_n), no activation.
    o = jnp.dot(h_ref[...], w3_ref[...], preferred_element_type=jnp.float32)
    out_ref[...] = (o + b3_ref[...]).astype(out_ref.dtype)


def prepare_decoder_params(params, latent_dim, output_dim):
    """One-time pad + cast of the weights (avoid per-forward jnp.pad of the largest tensor)."""
    latent_pad = _round_up(latent_dim, 128)
    out_pad = _round_up(output_dim, 128)
    w1 = jnp.pad(params["w1"].astype(jnp.bfloat16), ((0, latent_pad - latent_dim), (0, 0)))
    w2 = params["w2"].astype(jnp.bfloat16)
    w3 = jnp.pad(params["w3"].astype(jnp.bfloat16), ((0, 0), (0, out_pad - output_dim)))
    b1 = params["b1"].astype(jnp.float32).reshape(1, H1)
    b2 = params["b2"].astype(jnp.float32).reshape(1, H2)
    b3 = jnp.pad(params["b3"].astype(jnp.float32).reshape(1, output_dim),
                 ((0, 0), (0, out_pad - output_dim)))
    return {"w1": w1, "b1": b1, "w2": w2, "b2": b2, "w3": w3, "b3": b3,
            "latent_dim": latent_dim, "output_dim": output_dim,
            "latent_pad": latent_pad, "out_pad": out_pad}


def _pick_tiles(B, latent_pad, out_pad, block_b, block_n, budget):
    if block_b is None:
        block_b = min(256, _round_up(B, 16))
    block_b = max(16, _round_up(block_b, 16))

    if block_n is None:
        # Largest 128-multiple that divides out_pad and fits the VMEM budget (so the
        # prepared w3/b3 never need a per-call re-pad). 128 always qualifies.
        block_n = 128
        for cand in range(out_pad, 0, -128):
            if out_pad % cand != 0:
                continue
            n_tiled = cand < out_pad
            if _footprint_bytes(block_b, cand, latent_pad, n_tiled, True) <= budget:
                block_n = cand
                break
    block_n = min(_round_up(block_n, 128), out_pad)

    # v7x has 2 TensorCores: avoid a (1,1) grid for non-trivial batches so the "parallel"
    # batch axis gives both cores work.
    if out_pad // block_n == 1 and _round_up(B, block_b) // block_b == 1 and B >= 32:
        block_b = max(16, _round_up(block_b // 2, 16))
    return block_b, block_n


def decoder_forward(z, prepared, *, block_b=None, block_n=None, out_dtype=jnp.float32,
                    single_buffer_weights=True):
    """z: (B, latent_dim) f32/bf16. prepared: output of prepare_decoder_params."""
    B, latent_dim = z.shape
    assert latent_dim == prepared["latent_dim"]
    latent_pad = prepared["latent_pad"]
    out_pad = prepared["out_pad"]
    out_dim = prepared["output_dim"]

    vmem_cap = _vmem_capacity_bytes()
    budget = min(vmem_cap // 2, 48 << 20)
    block_b, block_n = _pick_tiles(B, latent_pad, out_pad, block_b, block_n, budget)

    b_pad = _round_up(B, block_b)
    n_pad = _round_up(out_pad, block_n)
    n_tiles = n_pad // block_n
    n_tiled = n_tiles > 1

    w1, b1, w2, b2, w3, b3 = (prepared[k] for k in ("w1", "b1", "w2", "b2", "w3", "b3"))
    if n_pad > out_pad:  # only reachable if the caller forces a non-dividing block_n
        w3 = jnp.pad(w3, ((0, 0), (0, n_pad - out_pad)))
        b3 = jnp.pad(b3, ((0, 0), (0, n_pad - out_pad)))

    zb = jnp.pad(z.astype(jnp.bfloat16), ((0, b_pad - B), (0, latent_pad - latent_dim)))

    # Explicit VMEM limit derived from the (conservative, double-buffered-weight) footprint.
    footprint = _footprint_bytes(block_b, block_n, latent_pad, n_tiled, False)
    vmem_limit = int(min(vmem_cap, max(32 << 20, 2 * footprint)))

    grid = (b_pad // block_b, n_tiles)

    def build(single_buf):
        pipe = dict(pipeline_mode=pl.Buffered(1)) if single_buf else {}
        w3_pipe = {} if n_tiled else dict(pipe)  # w3/b3 only constant-index when N untiled
        in_specs = [
            pl.BlockSpec((block_b, latent_pad), lambda i, j: (i, 0)),
            pl.BlockSpec((latent_pad, H1), lambda i, j: (0, 0), **pipe),
            pl.BlockSpec((1, H1), lambda i, j: (0, 0), **pipe),
            pl.BlockSpec((H1, H2), lambda i, j: (0, 0), **pipe),
            pl.BlockSpec((1, H2), lambda i, j: (0, 0), **pipe),
            pl.BlockSpec((H2, block_n), lambda i, j: (0, j), **w3_pipe),
            pl.BlockSpec((1, block_n), lambda i, j: (0, j), **w3_pipe),
        ]
        return pl.pallas_call(
            decoder_kernel,
            out_shape=jax.ShapeDtypeStruct((b_pad, n_pad), out_dtype),
            grid_spec=pltpu.PrefetchScalarGridSpec(
                num_scalar_prefetch=0,
                grid=grid,
                in_specs=in_specs,
                out_specs=pl.BlockSpec((block_b, block_n), lambda i, j: (i, j)),
                scratch_shapes=[pltpu.VMEM((block_b, H2), jnp.bfloat16)],
            ),
            compiler_params=pltpu.CompilerParams(
                # batch axis sharded across cores; N axis must stay "arbitrary" (innermost)
                # for the fc1 scratch cache under pl.when(j == 0) to be valid.
                dimension_semantics=("parallel", "arbitrary"),
                vmem_limit_bytes=vmem_limit,
            ),
        )

    args = (zb, w1, b1, w2, b2, w3, b3)
    if single_buffer_weights:
        try:
            out_padded = build(True)(*args)
        except Exception:
            out_padded = build(False)(*args)  # fallback if Buffered(1) is rejected
    else:
        out_padded = build(False)(*args)

    if b_pad == B and n_pad == out_dim:
        return out_padded  # no padding introduced -> skip the crop copy
    return out_padded[:B, :out_dim]


def init_decoder_params(key, latent_dim, output_dim):
    """Deterministic init mimicking nn.Linear's U(-1/sqrt(fan_in), 1/sqrt(fan_in)).

    Weights stored (in_features, out_features) bf16; biases (1, out_features) f32.
    """
    dims = [(latent_dim, H1), (H1, H2), (H2, output_dim)]
    params = {}
    keys = jax.random.split(key, 2 * len(dims))
    for idx, (fan_in, fan_out) in enumerate(dims):
        bound = 1.0 / jnp.sqrt(jnp.float32(fan_in))
        w = jax.random.uniform(keys[2 * idx], (fan_in, fan_out),
                               minval=-bound, maxval=bound, dtype=jnp.float32)
        b = jax.random.uniform(keys[2 * idx + 1], (1, fan_out),
                               minval=-bound, maxval=bound, dtype=jnp.float32)
        params[f"w{idx + 1}"] = w.astype(jnp.bfloat16)
        params[f"b{idx + 1}"] = b
    return params


def decoder_reference(z, params):
    """Pure-JAX reference mirroring the kernel's bf16-operand / f32-accumulate math."""
    f32, bf16 = jnp.float32, jnp.bfloat16
    w1 = params["w1"].astype(f32)
    w2 = params["w2"].astype(f32)
    w3 = params["w3"].astype(f32)
    h = z.astype(bf16).astype(f32)
    h = jnp.maximum(h @ w1 + params["b1"], 0.0)
    h = h.astype(bf16).astype(f32)
    h = jnp.maximum(h @ w2 + params["b2"], 0.0)
    h = h.astype(bf16).astype(f32)
    return h @ w3 + params["b3"]


if __name__ == "__main__":
    B, latent_dim, output_dim = 8, 32, 64  # small demo shapes (padded internally)

    key = jax.random.PRNGKey(0)
    kz, kp = jax.random.split(key)
    z = jax.random.normal(kz, (B, latent_dim), dtype=jnp.float32)
    params = init_decoder_params(kp, latent_dim, output_dim)
    prepared = prepare_decoder_params(params, latent_dim, output_dim)

    out = decoder_forward(z, prepared)
    out = jax.block_until_ready(out)

    ref = decoder_reference(z, params)
    assert out.shape == (B, output_dim)
    assert jnp.allclose(out, ref, atol=2e-3, rtol=2e-3), "mismatch vs JAX reference"

    print("KERNEL_OK")
</pallas_src>

<mosaic_0001>
module attributes {stable_mosaic.version = 11 : i64} {
  func.func @decoder_kernel(%arg0: i32, %arg1: i32, %arg2: memref<16x128xbf16, #tpu.memory_space<vmem>>, %arg3: memref<128x256xbf16, #tpu.memory_space<vmem>>, %arg4: memref<1x256xf32, #tpu.memory_space<vmem>>, %arg5: memref<256x512xbf16, #tpu.memory_space<vmem>>, %arg6: memref<1x512xf32, #tpu.memory_space<vmem>>, %arg7: memref<512x128xbf16, #tpu.memory_space<vmem>>, %arg8: memref<1x128xf32, #tpu.memory_space<vmem>>, %arg9: memref<16x128xf32, #tpu.memory_space<vmem>>, %arg10: memref<16x512xbf16, #tpu.memory_space<vmem>>) attributes {dimension_semantics = [#tpu.dimension_semantics<parallel>, #tpu.dimension_semantics<arbitrary>], iteration_bounds = array<i64: 1, 1>, scalar_prefetch = 0 : i64, scratch_operands = 1 : i64, tpu.core_type = #tpu.core_type<tc>, window_params = [{transform_indices = @transform_0, window_bounds = array<i64: 16, 128>}, {pipeline_mode = #tpu.pipeline_mode<synchronous>, transform_indices = @transform_1, window_bounds = array<i64: 128, 256>}, {pipeline_mode = #tpu.pipeline_mode<synchronous>, transform_indices = @transform_2, window_bounds = array<i64: 1, 256>}, {pipeline_mode = #tpu.pipeline_mode<synchronous>, transform_indices = @transform_3, window_bounds = array<i64: 256, 512>}, {pipeline_mode = #tpu.pipeline_mode<synchronous>, transform_indices = @transform_4, window_bounds = array<i64: 1, 512>}, {pipeline_mode = #tpu.pipeline_mode<synchronous>, transform_indices = @transform_5, window_bounds = array<i64: 512, 128>}, {pipeline_mode = #tpu.pipeline_mode<synchronous>, transform_indices = @transform_6, window_bounds = array<i64: 1, 128>}, {transform_indices = @transform_7, window_bounds = array<i64: 16, 128>}]} {
    %c0_i32 = arith.constant 0 : i32
    %0 = arith.cmpi eq, %arg1, %c0_i32 : i32
    %1 = arith.extui %0 : i1 to i32
    %c0_i32_0 = arith.constant 0 : i32
    %2 = arith.cmpi ne, %1, %c0_i32_0 : i32
    scf.if %2 {
      %c0_8 = arith.constant 0 : index
      %c0_9 = arith.constant 0 : index
      %10 = vector.load %arg2[%c0_8, %c0_9] : memref<16x128xbf16, #tpu.memory_space<vmem>>, vector<16x128xbf16>
      %c0_10 = arith.constant 0 : index
      %c0_11 = arith.constant 0 : index
      %11 = vector.load %arg3[%c0_10, %c0_11] : memref<128x256xbf16, #tpu.memory_space<vmem>>, vector<128x256xbf16>
      %cst_12 = arith.constant dense<0.000000e+00> : vector<16x256xf32>
      %12 = tpu.matmul %10, %11, %cst_12 {dimension_numbers = #tpu.dot_dimension_numbers<[1], [0], [0], [1], [0, 0, 1, 1], [], []>} : vector<16x128xbf16>, vector<128x256xbf16>, vector<16x256xf32> -> vector<16x256xf32>
      %c0_13 = arith.constant 0 : index
      %c0_14 = arith.constant 0 : index
      %13 = vector.load %arg4[%c0_13, %c0_14] : memref<1x256xf32, #tpu.memory_space<vmem>>, vector<1x256xf32>
      %14 = vector.broadcast %13 : vector<1x256xf32> to vector<16x256xf32>
      %15 = arith.addf %12, %14 : vector<16x256xf32>
      %cst_15 = arith.constant 0.000000e+00 : f32
      %16 = vector.broadcast %cst_15 : f32 to vector<16x256xf32>
      %17 = arith.maximumf %15, %16 : vector<16x256xf32>
      %18 = arith.truncf %17 : vector<16x256xf32> to vector<16x256xbf16>
      %c0_16 = arith.constant 0 : index
      %c0_17 = arith.constant 0 : index
      %19 = vector.load %arg5[%c0_16, %c0_17] : memref<256x512xbf16, #tpu.memory_space<vmem>>, vector<256x512xbf16>
      %cst_18 = arith.constant dense<0.000000e+00> : vector<16x512xf32>
      %20 = tpu.matmul %18, %19, %cst_18 {dimension_numbers = #tpu.dot_dimension_numbers<[1], [0], [0], [1], [0, 0, 1, 1], [], []>} : vector<16x256xbf16>, vector<256x512xbf16>, vector<16x512xf32> -> vector<16x512xf32>
      %c0_19 = arith.constant 0 : index
      %c0_20 = arith.constant 0 : index
      %21 = vector.load %arg6[%c0_19, %c0_20] : memref<1x512xf32, #tpu.memory_space<vmem>>, vector<1x512xf32>
      %22 = vector.broadcast %21 : vector<1x512xf32> to vector<16x512xf32>
      %23 = arith.addf %20, %22 : vector<16x512xf32>
      %cst_21 = arith.constant 0.000000e+00 : f32
      %24 = vector.broadcast %cst_21 : f32 to vector<16x512xf32>
      %25 = arith.maximumf %23, %24 : vector<16x512xf32>
      %26 = arith.truncf %25 : vector<16x512xf32> to vector<16x512xbf16>
      %c0_22 = arith.constant 0 : index
      %c0_23 = arith.constant 0 : index
      %27 = vector.load %arg10[%c0_22, %c0_23] : memref<16x512xbf16, #tpu.memory_space<vmem>>, vector<16x512xbf16>
      tpu.vector_store %arg10[%c0_22, %c0_23], %26 {strides = array<i32>} : memref<16x512xbf16, #tpu.memory_space<vmem>>, vector<16x512xbf16>,
    } else {
    }
    %c0 = arith.constant 0 : index
    %c0_1 = arith.constant 0 : index
    %3 = vector.load %arg10[%c0, %c0_1] : memref<16x512xbf16, #tpu.memory_space<vmem>>, vector<16x512xbf16>
    %c0_2 = arith.constant 0 : index
    %c0_3 = arith.constant 0 : index
    %4 = vector.load %arg7[%c0_2, %c0_3] : memref<512x128xbf16, #tpu.memory_space<vmem>>, vector<512x128xbf16>
    %cst = arith.constant dense<0.000000e+00> : vector<16x128xf32>
    %5 = tpu.matmul %3, %4, %cst {dimension_numbers = #tpu.dot_dimension_numbers<[1], [0], [0], [1], [0, 0, 1, 1], [], []>} : vector<16x512xbf16>, vector<512x128xbf16>, vector<16x128xf32> -> vector<16x128xf32>
    %c0_4 = arith.constant 0 : index
    %c0_5 = arith.constant 0 : index
    %6 = vector.load %arg8[%c0_4, %c0_5] : memref<1x128xf32, #tpu.memory_space<vmem>>, vector<1x128xf32>
    %7 = vector.broadcast %6 : vector<1x128xf32> to vector<16x128xf32>
    %8 = arith.addf %5, %7 : vector<16x128xf32>
    %c0_6 = arith.constant 0 : index
    %c0_7 = arith.constant 0 : index
    %9 = vector.load %arg9[%c0_6, %c0_7] : memref<16x128xf32, #tpu.memory_space<vmem>>, vector<16x128xf32>
    tpu.vector_store %arg9[%c0_6, %c0_7], %8 {strides = array<i32>} : memref<16x128xf32, #tpu.memory_space<vmem>>, vector<16x128xf32>,
    return
  }
  func.func @transform_0(%arg0: i32, %arg1: i32) -> (i32, i32) {
    %c0_i32 = arith.constant 0 : i32
    %c0_i32_0 = arith.constant 0 : i32
    return %arg0, %c0_i32 : i32, i32
  }
  func.func @transform_1(%arg0: i32, %arg1: i32) -> (i32, i32) {
    %c0_i32 = arith.constant 0 : i32
    %c0_i32_0 = arith.constant 0 : i32
    %c0_i32_1 = arith.constant 0 : i32
    return %c0_i32, %c0_i32_0 : i32, i32
  }
  func.func @transform_2(%arg0: i32, %arg1: i32) -> (i32, i32) {
    %c0_i32 = arith.constant 0 : i32
    %c0_i32_0 = arith.constant 0 : i32
    %c0_i32_1 = arith.constant 0 : i32
    return %c0_i32, %c0_i32_0 : i32, i32
  }
  func.func @transform_3(%arg0: i32, %arg1: i32) -> (i32, i32) {
    %c0_i32 = arith.constant 0 : i32
    %c0_i32_0 = arith.constant 0 : i32
    %c0_i32_1 = arith.constant 0 : i32
    return %c0_i32, %c0_i32_0 : i32, i32
  }
  func.func @transform_4(%arg0: i32, %arg1: i32) -> (i32, i32) {
    %c0_i32 = arith.constant 0 : i32
    %c0_i32_0 = arith.constant 0 : i32
    %c0_i32_1 = arith.constant 0 : i32
    return %c0_i32, %c0_i32_0 : i32, i32
  }
  func.func @transform_5(%arg0: i32, %arg1: i32) -> (i32, i32) {
    %c0_i32 = arith.constant 0 : i32
    %c0_i32_0 = arith.constant 0 : i32
    return %c0_i32, %arg1 : i32, i32
  }
  func.func @transform_6(%arg0: i32, %arg1: i32) -> (i32, i32) {
    %c0_i32 = arith.constant 0 : i32
    %c0_i32_0 = arith.constant 0 : i32
    return %c0_i32, %arg1 : i32, i32
  }
  func.func @transform_7(%arg0: i32, %arg1: i32) -> (i32, i32) {
    %c0_i32 = arith.constant 0 : i32
    return %arg0, %arg1 : i32, i32
  }
}

module attributes {stable_mosaic.version = 11 : i64} {
  func.func @decoder_kernel(%arg0: i32, %arg1: i32, %arg2: memref<16x128xbf16, #tpu.memory_space<vmem>>, %arg3: memref<128x256xbf16, #tpu.memory_space<vmem>>, %arg4: memref<1x256xf32, #tpu.memory_space<vmem>>, %arg5: memref<256x512xbf16, #tpu.memory_space<vmem>>, %arg6: memref<1x512xf32, #tpu.memory_space<vmem>>, %arg7: memref<512x128xbf16, #tpu.memory_space<vmem>>, %arg8: memref<1x128xf32, #tpu.memory_space<vmem>>, %arg9: memref<16x128xf32, #tpu.memory_space<vmem>>, %arg10: memref<16x512xbf16, #tpu.memory_space<vmem>>) attributes {dimension_semantics = [#tpu.dimension_semantics<parallel>, #tpu.dimension_semantics<arbitrary>], iteration_bounds = array<i64: 1, 1>, scalar_prefetch = 0 : i64, scratch_operands = 1 : i64, tpu.core_type = #tpu.core_type<tc>, window_params = [{transform_indices = @transform_0, window_bounds = array<i64: 16, 128>}, {pipeline_mode = #tpu.pipeline_mode<synchronous>, transform_indices = @transform_1, window_bounds = array<i64: 128, 256>}, {pipeline_mode = #tpu.pipeline_mode<synchronous>, transform_indices = @transform_2, window_bounds = array<i64: 1, 256>}, {pipeline_mode = #tpu.pipeline_mode<synchronous>, transform_indices = @transform_3, window_bounds = array<i64: 256, 512>}, {pipeline_mode = #tpu.pipeline_mode<synchronous>, transform_indices = @transform_4, window_bounds = array<i64: 1, 512>}, {transform_indices = @transform_5, window_bounds = array<i64: 512, 128>}, {transform_indices = @transform_6, window_bounds = array<i64: 1, 128>}, {transform_indices = @transform_7, window_bounds = array<i64: 16, 128>}]} {
    %c0_i32 = arith.constant 0 : i32
    %0 = arith.cmpi eq, %arg1, %c0_i32 : i32
    %1 = arith.extui %0 : i1 to i32
    %c0_i32_0 = arith.constant 0 : i32
    %2 = arith.cmpi ne, %1, %c0_i32_0 : i32
    scf.if %2 {
      %c0_8 = arith.constant 0 : index
      %c0_9 = arith.constant 0 : index
      %10 = vector.load %arg2[%c0_8, %c0_9] : memref<16x128xbf16, #tpu.memory_space<vmem>>, vector<16x128xbf16>
      %c0_10 = arith.constant 0 : index
      %c0_11 = arith.constant 0 : index
      %11 = vector.load %arg3[%c0_10, %c0_11] : memref<128x256xbf16, #tpu.memory_space<vmem>>, vector<128x256xbf16>
      %cst_12 = arith.constant dense<0.000000e+00> : vector<16x256xf32>
      %12 = tpu.matmul %10, %11, %cst_12 {dimension_numbers = #tpu.dot_dimension_numbers<[1], [0], [0], [1], [0, 0, 1, 1], [], []>} : vector<16x128xbf16>, vector<128x256xbf16>, vector<16x256xf32> -> vector<16x256xf32>
      %c0_13 = arith.constant 0 : index
      %c0_14 = arith.constant 0 : index
      %13 = vector.load %arg4[%c0_13, %c0_14] : memref<1x256xf32, #tpu.memory_space<vmem>>, vector<1x256xf32>
      %14 = vector.broadcast %13 : vector<1x256xf32> to vector<16x256xf32>
      %15 = arith.addf %12, %14 : vector<16x256xf32>
      %cst_15 = arith.constant 0.000000e+00 : f32
      %16 = vector.broadcast %cst_15 : f32 to vector<16x256xf32>
      %17 = arith.maximumf %15, %16 : vector<16x256xf32>
      %18 = arith.truncf %17 : vector<16x256xf32> to vector<16x256xbf16>
      %c0_16 = arith.constant 0 : index
      %c0_17 = arith.constant 0 : index
      %19 = vector.load %arg5[%c0_16, %c0_17] : memref<256x512xbf16, #tpu.memory_space<vmem>>, vector<256x512xbf16>
      %cst_18 = arith.constant dense<0.000000e+00> : vector<16x512xf32>
      %20 = tpu.matmul %18, %19, %cst_18 {dimension_numbers = #tpu.dot_dimension_numbers<[1], [0], [0], [1], [0, 0, 1, 1], [], []>} : vector<16x256xbf16>, vector<256x512xbf16>, vector<16x512xf32> -> vector<16x512xf32>
      %c0_19 = arith.constant 0 : index
      %c0_20 = arith.constant 0 : index
      %21 = vector.load %arg6[%c0_19, %c0_20] : memref<1x512xf32, #tpu.memory_space<vmem>>, vector<1x512xf32>
      %22 = vector.broadcast %21 : vector<1x512xf32> to vector<16x512xf32>
      %23 = arith.addf %20, %22 : vector<16x512xf32>
      %cst_21 = arith.constant 0.000000e+00 : f32
      %24 = vector.broadcast %cst_21 : f32 to vector<16x512xf32>
      %25 = arith.maximumf %23, %24 : vector<16x512xf32>
      %26 = arith.truncf %25 : vector<16x512xf32> to vector<16x512xbf16>
      %c0_22 = arith.constant 0 : index
      %c0_23 = arith.constant 0 : index
      %27 = vector.load %arg10[%c0_22, %c0_23] : memref<16x512xbf16, #tpu.memory_space<vmem>>, vector<16x512xbf16>
      tpu.vector_store %arg10[%c0_22, %c0_23], %26 {strides = array<i32>} : memref<16x512xbf16, #tpu.memory_space<vmem>>, vector<16x512xbf16>,
    } else {
    }
    %c0 = arith.constant 0 : index
    %c0_1 = arith.constant 0 : index
    %3 = vector.load %arg10[%c0, %c0_1] : memref<16x512xbf16, #tpu.memory_space<vmem>>, vector<16x512xbf16>
    %c0_2 = arith.constant 0 : index
    %c0_3 = arith.constant 0 : index
    %4 = vector.load %arg7[%c0_2, %c0_3] : memref<512x128xbf16, #tpu.memory_space<vmem>>, vector<512x128xbf16>
    %cst = arith.constant dense<0.000000e+00> : vector<16x128xf32>
    %5 = tpu.matmul %3, %4, %cst {dimension_numbers = #tpu.dot_dimension_numbers<[1], [0], [0], [1], [0, 0, 1, 1], [], []>} : vector<16x512xbf16>, vector<512x128xbf16>, vector<16x128xf32> -> vector<16x128xf32>
    %c0_4 = arith.constant 0 : index
    %c0_5 = arith.constant 0 : index
    %6 = vector.load %arg8[%c0_4, %c0_5] : memref<1x128xf32, #tpu.memory_space<vmem>>, vector<1x128xf32>
    %7 = vector.broadcast %6 : vector<1x128xf32> to vector<16x128xf32>
    %8 = arith.addf %5, %7 : vector<16x128xf32>
    %c0_6 = arith.constant 0 : index
    %c0_7 = arith.constant 0 : index
    %9 = vector.load %arg9[%c0_6, %c0_7] : memref<16x128xf32, #tpu.memory_space<vmem>>, vector<16x128xf32>
    tpu.vector_store %arg9[%c0_6, %c0_7], %8 {strides = array<i32>} : memref<16x128xf32, #tpu.memory_space<vmem>>, vector<16x128xf32>,
    return
  }
  func.func @transform_0(%arg0: i32, %arg1: i32) -> (i32, i32) {
    %c0_i32 = arith.constant 0 : i32
    %c0_i32_0 = arith.constant 0 : i32
    return %arg0, %c0_i32 : i32, i32
  }
  func.func @transform_1(%arg0: i32, %arg1: i32) -> (i32, i32) {
    %c0_i32 = arith.constant 0 : i32
    %c0_i32_0 = arith.constant 0 : i32
    %c0_i32_1 = arith.constant 0 : i32
    return %c0_i32, %c0_i32_0 : i32, i32
  }
  func.func @transform_2(%arg0: i32, %arg1: i32) -> (i32, i32) {
    %c0_i32 = arith.constant 0 : i32
    %c0_i32_0 = arith.constant 0 : i32
    %c0_i32_1 = arith.constant 0 : i32
    return %c0_i32, %c0_i32_0 : i32, i32
  }
  func.func @transform_3(%arg0: i32, %arg1: i32) -> (i32, i32) {
    %c0_i32 = arith.constant 0 : i32
    %c0_i32_0 = arith.constant 0 : i32
    %c0_i32_1 = arith.constant 0 : i32
    return %c0_i32, %c0_i32_0 : i32, i32
  }
  func.func @transform_4(%arg0: i32, %arg1: i32) -> (i32, i32) {
    %c0_i32 = arith.constant 0 : i32
    %c0_i32_0 = arith.constant 0 : i32
    %c0_i32_1 = arith.constant 0 : i32
    return %c0_i32, %c0_i32_0 : i32, i32
  }
  func.func @transform_5(%arg0: i32, %arg1: i32) -> (i32, i32) {
    %c0_i32 = arith.constant 0 : i32
    %c0_i32_0 = arith.constant 0 : i32
    return %c0_i32, %arg1 : i32, i32
  }
  func.func @transform_6(%arg0: i32, %arg1: i32) -> (i32, i32) {
    %c0_i32 = arith.constant 0 : i32
    %c0_i32_0 = arith.constant 0 : i32
    return %c0_i32, %arg1 : i32, i32
  }
  func.func @transform_7(%arg0: i32, %arg1: i32) -> (i32, i32) {
    %c0_i32 = arith.constant 0 : i32
    return %arg0, %arg1 : i32, i32
  }
}

</mosaic_0001>

<llo_original>
// kernel: tpu_custom_call.1
$region0: #{tpu_custom_call.1}
  #allocation0 [shape = 'u32[]', space=smem, size = 0x4, offset = 0x4, fixed_abs, tag = 'smem constant byte address 0x4 - core index']
  #allocation1 [shape = 'u32[144,128]{1,0:T(1,128)}', space=vmem, size = 0x12000, scoped, tag = 'internal scratch']
  #allocation2 [shape = 'bf16[16,512]{1,0:T(8,128)(2,1)}', space=vmem, size = 0x4000, scoped, tag = 'scratch operand']
  %s0 = inlined_call_operand.hbm [shape: bf16[16,128], index: 0, kind: input, shape index: {}]
  %s1 = inlined_call_operand.hbm [shape: bf16[128,256], index: 1, kind: input, shape index: {}]
  %s2 = inlined_call_operand.vmem [shape: f32[1,256], index: 2, kind: input, shape index: {}]
  %s3 = inlined_call_operand.hbm [shape: bf16[256,512], index: 3, kind: input, shape index: {}]
  %s4 = inlined_call_operand.vmem [shape: f32[1,512], index: 4, kind: input, shape index: {}]
  %s5 = inlined_call_operand.hbm [shape: bf16[512,128], index: 5, kind: input, shape index: {}]
  %s6 = inlined_call_operand.vmem [shape: f32[1,128], index: 6, kind: input, shape index: {}]
  %s7 = inlined_call_operand.hbm [shape: f32[16,128], index: 7, kind: output, shape index: {}]
  %s8 = sld [smem:[#allocation0]]
  $region58: #{tpu_custom_call.1} parent=0
    _
  %s10 = ssub.s32 1, %s8
  %s11 = scalar_select 0, %s10, %s8
  $region1: #{tpu_custom_call.1} parent=0
    #allocation3 [shape = 'u8[4096]{0}', space=vmem, size = 0x1000, scoped, tag = 'input window, operand 0, single buffered']
    #allocation4 [shape = 's32[1]{0}', space=sflag, size = 0x4, scoped, tag = 'scoped memory for tpu_custom_call.1']
    #allocation5 [shape = 's32[1]{0}', space=sflag, size = 0x4, scoped, tag = 'scoped memory for tpu_custom_call.1']
    #allocation6 [shape = 'u8[65536]{0}', space=vmem, size = 0x10000, scoped, tag = 'input window, operand 1, single buffered']
    #allocation7 [shape = 's32[1]{0}', space=sflag, size = 0x4, scoped, tag = 'scoped memory for tpu_custom_call.1']
    #allocation8 [shape = 'u8[262144]{0}', space=vmem, size = 0x40000, scoped, tag = 'input window, operand 3, single buffered']
    #allocation9 [shape = 'u8[131072]{0}', space=vmem, size = 0x20000, scoped, tag = 'input window, operand 5, single buffered']
    #allocation10 [shape = 's32[1]{0}', space=sflag, size = 0x4, scoped, tag = 'scoped memory for tpu_custom_call.1']
    #allocation11 [shape = 'u8[8192]{0}', space=vmem, size = 0x2000, scoped, tag = 'output window, operand 0, single buffered']
    %12 = vsyncpa [#allocation4], 0
    %13 = vsyncpa [#allocation7], 0
    %14 = vsyncpa [#allocation10], 0
    %15 = vsyncpa [#allocation5], 0
    // Predicated region
    $region2: #{tpu_custom_call.1} parent=1 // pred_check
      _
    $region3: #{tpu_custom_call.1} parent=1 // pred_check_branch
      %17 = sbr.rel (0) target = $region5
    $region4: #{tpu_custom_call.1} parent=1 // pred_region
      %s19 = ssub.s32 128, 128
      %20 = vsyncadd [#allocation4], %s19
      %s21 = sshll.u32 [#allocation3], 4
      %s22 = int_to_ptr.vmem [resolvable:$true] %s21
      %27 = dma.hbm_to_vmem [thread:$0]  %s0, 128, %s22, [#allocation4], 64, 64, 4
    $region5: #{tpu_custom_call.1} parent=1 // pred_fallthru
      _
    // Predicated region
    $region6: #{tpu_custom_call.1} parent=1 // pred_check
      _
    $region7: #{tpu_custom_call.1} parent=1 // pred_check_branch
      %29 = sbr.rel (0) target = $region9
    $region8: #{tpu_custom_call.1} parent=1 // pred_region
      %s31 = ssub.s32 2048, 2048
      %32 = vsyncadd [#allocation7], %s31
      %s33 = sshll.u32 [#allocation6], 4
      %s34 = int_to_ptr.vmem [resolvable:$true] %s33
      %39 = dma.hbm_to_vmem [thread:$0]  %s1, 2048, %s34, [#allocation7], 128, 128, 8
    $region9: #{tpu_custom_call.1} parent=1 // pred_fallthru
      _
    // Predicated region
    $region10: #{tpu_custom_call.1} parent=1 // pred_check
      _
    $region11: #{tpu_custom_call.1} parent=1 // pred_check_branch
      %41 = sbr.rel (0) target = $region13
    $region12: #{tpu_custom_call.1} parent=1 // pred_region
      _
    $region13: #{tpu_custom_call.1} parent=1 // pred_fallthru
      _
    // Predicated region
    $region14: #{tpu_custom_call.1} parent=1 // pred_check
      _
    $region15: #{tpu_custom_call.1} parent=1 // pred_check_branch
      %43 = sbr.rel (0) target = $region17
    $region16: #{tpu_custom_call.1} parent=1 // pred_region
      %s45 = ssub.s32 8192, 8192
      %46 = vsyncadd [#allocation7], %s45
      %s47 = sshll.u32 [#allocation8], 4
      %s48 = int_to_ptr.vmem [resolvable:$true] %s47
      %53 = dma.hbm_to_vmem [thread:$0]  %s3, 8192, %s48, [#allocation7], 256, 256, 16
    $region17: #{tpu_custom_call.1} parent=1 // pred_fallthru
      _
    // Predicated region
    $region18: #{tpu_custom_call.1} parent=1 // pred_check
      _
    $region19: #{tpu_custom_call.1} parent=1 // pred_check_branch
      %55 = sbr.rel (0) target = $region21
    $region20: #{tpu_custom_call.1} parent=1 // pred_region
      _
    $region21: #{tpu_custom_call.1} parent=1 // pred_fallthru
      _
    // Predicated region
    $region22: #{tpu_custom_call.1} parent=1 // pred_check
      _
    $region23: #{tpu_custom_call.1} parent=1 // pred_check_branch
      %57 = sbr.rel (0) target = $region25
    $region24: #{tpu_custom_call.1} parent=1 // pred_region
      %s59 = ssub.s32 4096, 4096
      %60 = vsyncadd [#allocation10], %s59
      %s61 = sshll.u32 [#allocation9], 4
      %s62 = int_to_ptr.vmem [resolvable:$true] %s61
      %67 = dma.hbm_to_vmem [thread:$0]  %s5, 4096, %s62, [#allocation10], 64, 64, 4
    $region25: #{tpu_custom_call.1} parent=1 // pred_fallthru
      _
    // Predicated region
    $region26: #{tpu_custom_call.1} parent=1 // pred_check
      _
    $region27: #{tpu_custom_call.1} parent=1 // pred_check_branch
      %69 = sbr.rel (0) target = $region29
    $region28: #{tpu_custom_call.1} parent=1 // pred_region
      _
    $region29: #{tpu_custom_call.1} parent=1 // pred_fallthru
      _
    // Predicated region
    $region30: #{tpu_custom_call.1} parent=1 // pred_check
      _
    $region31: #{tpu_custom_call.1} parent=1 // pred_check_branch
      %71 = sbr.rel (0) target = $region33
    $region32: #{tpu_custom_call.1} parent=1 // pred_region
      %72 = dma.done [#allocation4], 128
    $region33: #{tpu_custom_call.1} parent=1 // pred_fallthru
      _
    // Predicated region
    $region34: #{tpu_custom_call.1} parent=1 // pred_check
      _
    $region35: #{tpu_custom_call.1} parent=1 // pred_check_branch
      %74 = sbr.rel (0) target = $region37
    $region36: #{tpu_custom_call.1} parent=1 // pred_region
      %75 = dma.done [#allocation7], 2048
    $region37: #{tpu_custom_call.1} parent=1 // pred_fallthru
      _
    // Predicated region
    $region38: #{tpu_custom_call.1} parent=1 // pred_check
      _
    $region39: #{tpu_custom_call.1} parent=1 // pred_check_branch
      %77 = sbr.rel (0) target = $region41
    $region40: #{tpu_custom_call.1} parent=1 // pred_region
      %78 = dma.done [#allocation7], 8192
    $region41: #{tpu_custom_call.1} parent=1 // pred_fallthru
      _
    // Predicated region
    $region42: #{tpu_custom_call.1} parent=1 // pred_check
      _
    $region43: #{tpu_custom_call.1} parent=1 // pred_check_branch
      %80 = sbr.rel (0) target = $region45
    $region44: #{tpu_custom_call.1} parent=1 // pred_region
      %81 = dma.done [#allocation10], 4096
    $region45: #{tpu_custom_call.1} parent=1 // pred_fallthru
      _
    %p83 = scmp.eq.s32.totalorder 0, 0
    // Predicated region
    $region46: #{tpu_custom_call.1} parent=1 // pred_check
      %p84 = pneg %p83
    $region47: #{tpu_custom_call.1} parent=1 // pred_check_branch
      %86 = sbr.rel (%p84) target = $region49
    $region48: #{tpu_custom_call.1} parent=1 // pred_region
      %v87 = vld [vmem:[#allocation3] sm:$0xf]
      %v88 = vld [vmem:[#allocation3 + $0x4] sm:$0xf]
      %v89 = vld [vmem:[#allocation6] sm:$0xff]
      %v90 = vld [vmem:[#allocation6 + $0x8] sm:$0xff]
      %v91 = vld [vmem:[#allocation6 + $0x10] sm:$0xff]
      %v92 = vld [vmem:[#allocation6 + $0x18] sm:$0xff]
      %v93 = vld [vmem:[#allocation6 + $0x20] sm:$0xff]
      %v94 = vld [vmem:[#allocation6 + $0x28] sm:$0xff]
      %v95 = vld [vmem:[#allocation6 + $0x30] sm:$0xff]
      %v96 = vld [vmem:[#allocation6 + $0x38] sm:$0xff]
      %v97 = vld [vmem:[#allocation6 + $0x40] sm:$0xff]
      %v98 = vld [vmem:[#allocation6 + $0x48] sm:$0xff]
      %v99 = vld [vmem:[#allocation6 + $0x50] sm:$0xff]
      %v100 = vld [vmem:[#allocation6 + $0x58] sm:$0xff]
      %v101 = vld [vmem:[#allocation6 + $0x60] sm:$0xff]
      %v102 = vld [vmem:[#allocation6 + $0x68] sm:$0xff]
      %v103 = vld [vmem:[#allocation6 + $0x70] sm:$0xff]
      %v104 = vld [vmem:[#allocation6 + $0x78] sm:$0xff]
      %v105 = vld [vmem:[%s2] sm:$0x3]
      %v107 = vlaneseq
      %v108 = vshrl.u32 %v107, 7
      %v109 = vsub.s32 0, %v108
      %v110 = vrot.slane %v105, %v109
      %v111 = vlaneseq
      %v112 = vshrl.u32 %v111, 7
      %v113 = vsub.s32 1, %v112
      %v114 = vrot.slane %v105, %v113
      %v119 = vunpack.c.l.b16 %v87
      %v120 = vunpack.c.l.b16 %v88
      %v121 = vpack.c.b16 %v120, %v119
      %v139 = vunpack.c.l.b16 %v89
      %v140 = vunpack.c.h.b16 %v89
      %v141 = vunpack.c.l.b16 %v90
      %v142 = vunpack.c.h.b16 %v90
      %v143 = vunpack.c.l.b16 %v91
      %v144 = vunpack.c.h.b16 %v91
      %v145 = vunpack.c.l.b16 %v92
      %v146 = vunpack.c.h.b16 %v92
      %v147 = vunpack.c.l.b16 %v93
      %v148 = vunpack.c.h.b16 %v93
      %v149 = vunpack.c.l.b16 %v94
      %v150 = vunpack.c.h.b16 %v94
      %v151 = vunpack.c.l.b16 %v95
      %v152 = vunpack.c.h.b16 %v95
      %v153 = vunpack.c.l.b16 %v96
      %v154 = vunpack.c.h.b16 %v96
      %v155 = vunpack.c.l.b16 %v97
      %v156 = vunpack.c.h.b16 %v97
      %v157 = vunpack.c.l.b16 %v98
      %v158 = vunpack.c.h.b16 %v98
      %v159 = vunpack.c.l.b16 %v99
      %v160 = vunpack.c.h.b16 %v99
      %v161 = vunpack.c.l.b16 %v100
      %v162 = vunpack.c.h.b16 %v100
      %v163 = vunpack.c.l.b16 %v101
      %v164 = vunpack.c.h.b16 %v101
      %v165 = vunpack.c.l.b16 %v102
      %v166 = vunpack.c.h.b16 %v102
      %v167 = vunpack.c.l.b16 %v103
      %v168 = vunpack.c.h.b16 %v103
      %v169 = vunpack.c.l.b16 %v104
      %v170 = vunpack.c.h.b16 %v104
      %v171 = vpack.c.b16 %v141, %v139
      %v172 = vpack.c.b16 %v142, %v140
      %v173 = vpack.c.b16 %v145, %v143
      %v174 = vpack.c.b16 %v146, %v144
      %v175 = vpack.c.b16 %v149, %v147
      %v176 = vpack.c.b16 %v150, %v148
      %v177 = vpack.c.b16 %v153, %v151
      %v178 = vpack.c.b16 %v154, %v152
      %v179 = vpack.c.b16 %v157, %v155
      %v180 = vpack.c.b16 %v158, %v156
      %v181 = vpack.c.b16 %v161, %v159
      %v182 = vpack.c.b16 %v162, %v160
      %v183 = vpack.c.b16 %v165, %v163
      %v184 = vpack.c.b16 %v166, %v164
      %v185 = vpack.c.b16 %v169, %v167
      %v186 = vpack.c.b16 %v170, %v168
      %203 = vmatprep.subr.bf16.mxu0 %v186
      %204 = vmatpush1.bf16.msra.mxu0 %v185
      %205 = vmatprep.subr.bf16.mxu0 %v184
      %206 = vmatpush1.bf16.msra.mxu0 %v183
      %207 = vmatprep.subr.bf16.mxu0 %v182
      %208 = vmatpush1.bf16.msra.mxu0 %v181
      %209 = vmatprep.subr.bf16.mxu0 %v180
      %210 = vmatpush1.bf16.msra.mxu0 %v179
      %211 = vmatprep.subr.bf16.mxu0 %v178
      %212 = vmatpush1.bf16.msra.mxu0 %v177
      %213 = vmatprep.subr.bf16.mxu0 %v176
      %214 = vmatpush1.bf16.msra.mxu0 %v175
      %215 = vmatprep.subr.bf16.mxu0 %v174
      %216 = vmatpush1.bf16.msra.mxu0 %v173
      %217 = vmatprep.subr.bf16.mxu0 %v172
      %218 = vmatpush1.bf16.msra.mxu0 %v171
      %219 = vmatprep.subr.bf16.mxu0 0
      %220 = vmatpush2.bf16.msra.mxu0 0
      %221 = vmatprep.subr.bf16.mxu0 0
      %222 = vmatpush2.bf16.msra.mxu0 0
      %223 = vmatprep.subr.bf16.mxu0 0
      %224 = vmatpush2.bf16.msra.mxu0 0
      %225 = vmatprep.subr.bf16.mxu0 0
      %226 = vmatpush2.bf16.msra.mxu0 0
      %227 = vmatprep.subr.bf16.mxu0 0
      %228 = vmatpush2.bf16.msra.mxu0 0
      %229 = vmatprep.subr.bf16.mxu0 0
      %230 = vmatpush2.bf16.msra.mxu0 0
      %231 = vmatprep.subr.bf16.mxu0 0
      %232 = vmatpush2.bf16.msra.mxu0 0
      %233 = vmatprep.subr.bf16.mxu0 0
      %234 = vmatpush2.bf16.msra.mxu0 0
      %235 = vmatprep.mubr.bf16.mxu0 0
      %236 = vmatmul.mubr.bf16.gmra.mxu0 %v121
      %v237 = vpop.f32.mrf.mxu0
      %v238 = vadd.f32 %v110, %v237
      %v239 = vpop.f32.mrf.mxu0
      %v240 = vadd.f32 %v114, %v239
      %v241 = vpop.f32.mrf.mxu0
      %v242 = vadd.f32 %v110, %v241
      %v243 = vpop.f32.mrf.mxu0
      %v244 = vadd.f32 %v114, %v243
      %245 = vdwg.mxu0
      %v246 = vmax.f32 %v238, 0.0
      %v247 = vmax.f32 %v240, 0.0
      %v248 = vmax.f32 %v242, 0.0
      %v249 = vmax.f32 %v244, 0.0
      %v250 = vpack.c.bf16 %v248, %v246
      %v251 = vpack.c.bf16 %v249, %v247
      %v252 = vld [vmem:[#allocation8] sm:$0xff]
      %v253 = vld [vmem:[#allocation8 + $0x8] sm:$0xff]
      %v254 = vld [vmem:[#allocation8 + $0x10] sm:$0xff]
      %v255 = vld [vmem:[#allocation8 + $0x18] sm:$0xff]
      %v256 = vld [vmem:[#allocation8 + $0x20] sm:$0xff]
      %v257 = vld [vmem:[#allocation8 + $0x28] sm:$0xff]
      %v258 = vld [vmem:[#allocation8 + $0x30] sm:$0xff]
      %v259 = vld [vmem:[#allocation8 + $0x38] sm:$0xff]
      %v260 = vld [vmem:[#allocation8 + $0x40] sm:$0xff]
      %v261 = vld [vmem:[#allocation8 + $0x48] sm:$0xff]
      %v262 = vld [vmem:[#allocation8 + $0x50] sm:$0xff]
      %v263 = vld [vmem:[#allocation8 + $0x58] sm:$0xff]
      %v264 = vld [vmem:[#allocation8 + $0x60] sm:$0xff]
      %v265 = vld [vmem:[#allocation8 + $0x68] sm:$0xff]
      %v266 = vld [vmem:[#allocation8 + $0x70] sm:$0xff]
      %v267 = vld [vmem:[#allocation8 + $0x78] sm:$0xff]
      %v268 = vld [vmem:[#allocation8 + $0x80] sm:$0xff]
      %v269 = vld [vmem:[#allocation8 + $0x88] sm:$0xff]
      %v270 = vld [vmem:[#allocation8 + $0x90] sm:$0xff]
      %v271 = vld [vmem:[#allocation8 + $0x98] sm:$0xff]
      %v272 = vld [vmem:[#allocation8 + $0xa0] sm:$0xff]
      %v273 = vld [vmem:[#allocation8 + $0xa8] sm:$0xff]
      %v274 = vld [vmem:[#allocation8 + $0xb0] sm:$0xff]
      %v275 = vld [vmem:[#allocation8 + $0xb8] sm:$0xff]
      %v276 = vld [vmem:[#allocation8 + $0xc0] sm:$0xff]
      %v277 = vld [vmem:[#allocation8 + $0xc8] sm:$0xff]
      %v278 = vld [vmem:[#allocation8 + $0xd0] sm:$0xff]
      %v279 = vld [vmem:[#allocation8 + $0xd8] sm:$0xff]
      %v280 = vld [vmem:[#allocation8 + $0xe0] sm:$0xff]
      %v281 = vld [vmem:[#allocation8 + $0xe8] sm:$0xff]
      %v282 = vld [vmem:[#allocation8 + $0xf0] sm:$0xff]
      %v283 = vld [vmem:[#allocation8 + $0xf8] sm:$0xff]
      %v284 = vld [vmem:[#allocation8 + $0x100] sm:$0xff]
      %v285 = vld [vmem:[#allocation8 + $0x108] sm:$0xff]
      %v286 = vld [vmem:[#allocation8 + $0x110] sm:$0xff]
      %v287 = vld [vmem:[#allocation8 + $0x118] sm:$0xff]
      %v288 = vld [vmem:[#allocation8 + $0x120] sm:$0xff]
      %v289 = vld [vmem:[#allocation8 + $0x128] sm:$0xff]
      %v290 = vld [vmem:[#allocation8 + $0x130] sm:$0xff]
      %v291 = vld [vmem:[#allocation8 + $0x138] sm:$0xff]
      %v292 = vld [vmem:[#allocation8 + $0x140] sm:$0xff]
      %v293 = vld [vmem:[#allocation8 + $0x148] sm:$0xff]
      %v294 = vld [vmem:[#allocation8 + $0x150] sm:$0xff]
      %v295 = vld [vmem:[#allocation8 + $0x158] sm:$0xff]
      %v296 = vld [vmem:[#allocation8 + $0x160] sm:$0xff]
      %v297 = vld [vmem:[#allocation8 + $0x168] sm:$0xff]
      %v298 = vld [vmem:[#allocation8 + $0x170] sm:$0xff]
      %v299 = vld [vmem:[#allocation8 + $0x178] sm:$0xff]
      %v300 = vld [vmem:[#allocation8 + $0x180] sm:$0xff]
      %v301 = vld [vmem:[#allocation8 + $0x188] sm:$0xff]
      %v302 = vld [vmem:[#allocation8 + $0x190] sm:$0xff]
      %v303 = vld [vmem:[#allocation8 + $0x198] sm:$0xff]
      %v304 = vld [vmem:[#allocation8 + $0x1a0] sm:$0xff]
      %v305 = vld [vmem:[#allocation8 + $0x1a8] sm:$0xff]
      %v306 = vld [vmem:[#allocation8 + $0x1b0] sm:$0xff]
      %v307 = vld [vmem:[#allocation8 + $0x1b8] sm:$0xff]
      %v308 = vld [vmem:[#allocation8 + $0x1c0] sm:$0xff]
      %v309 = vld [vmem:[#allocation8 + $0x1c8] sm:$0xff]
      %v310 = vld [vmem:[#allocation8 + $0x1d0] sm:$0xff]
      %v311 = vld [vmem:[#allocation8 + $0x1d8] sm:$0xff]
      %v312 = vld [vmem:[#allocation8 + $0x1e0] sm:$0xff]
      %v313 = vld [vmem:[#allocation8 + $0x1e8] sm:$0xff]
      %v314 = vld [vmem:[#allocation8 + $0x1f0] sm:$0xff]
      %v315 = vld [vmem:[#allocation8 + $0x1f8] sm:$0xff]
      %v316 = vld [vmem:[%s4] sm:$0xf]
      %v318 = vlaneseq
      %v319 = vshrl.u32 %v318, 7
      %v320 = vsub.s32 0, %v319
      %v321 = vrot.slane %v316, %v320
      %v322 = vlaneseq
      %v323 = vshrl.u32 %v322, 7
      %v324 = vsub.s32 1, %v323
      %v325 = vrot.slane %v316, %v324
      %v326 = vlaneseq
      %v327 = vshrl.u32 %v326, 7
      %v328 = vsub.s32 2, %v327
      %v329 = vrot.slane %v316, %v328
      %v330 = vlaneseq
      %v331 = vshrl.u32 %v330, 7
      %v332 = vsub.s32 3, %v331
      %v333 = vrot.slane %v316, %v332
      %v402 = vunpack.c.l.b16 %v252
      %v403 = vunpack.c.h.b16 %v252
      %v404 = vunpack.c.l.b16 %v253
      %v405 = vunpack.c.h.b16 %v253
      %v406 = vunpack.c.l.b16 %v254
      %v407 = vunpack.c.h.b16 %v254
      %v408 = vunpack.c.l.b16 %v255
      %v409 = vunpack.c.h.b16 %v255
      %v410 = vunpack.c.l.b16 %v256
      %v411 = vunpack.c.h.b16 %v256
      %v412 = vunpack.c.l.b16 %v257
      %v413 = vunpack.c.h.b16 %v257
      %v414 = vunpack.c.l.b16 %v258
      %v415 = vunpack.c.h.b16 %v258
      %v416 = vunpack.c.l.b16 %v259
      %v417 = vunpack.c.h.b16 %v259
      %v418 = vunpack.c.l.b16 %v260
      %v419 = vunpack.c.h.b16 %v260
      %v420 = vunpack.c.l.b16 %v261
      %v421 = vunpack.c.h.b16 %v261
      %v422 = vunpack.c.l.b16 %v262
      %v423 = vunpack.c.h.b16 %v262
      %v424 = vunpack.c.l.b16 %v263
      %v425 = vunpack.c.h.b16 %v263
      %v426 = vunpack.c.l.b16 %v264
      %v427 = vunpack.c.h.b16 %v264
      %v428 = vunpack.c.l.b16 %v265
      %v429 = vunpack.c.h.b16 %v265
      %v430 = vunpack.c.l.b16 %v266
      %v431 = vunpack.c.h.b16 %v266
      %v432 = vunpack.c.l.b16 %v267
      %v433 = vunpack.c.h.b16 %v267
      %v434 = vunpack.c.l.b16 %v268
      %v435 = vunpack.c.h.b16 %v268
      %v436 = vunpack.c.l.b16 %v269
      %v437 = vunpack.c.h.b16 %v269
      %v438 = vunpack.c.l.b16 %v270
      %v439 = vunpack.c.h.b16 %v270
      %v440 = vunpack.c.l.b16 %v271
      %v441 = vunpack.c.h.b16 %v271
      %v442 = vunpack.c.l.b16 %v272
      %v443 = vunpack.c.h.b16 %v272
      %v444 = vunpack.c.l.b16 %v273
      %v445 = vunpack.c.h.b16 %v273
      %v446 = vunpack.c.l.b16 %v274
      %v447 = vunpack.c.h.b16 %v274
      %v448 = vunpack.c.l.b16 %v275
      %v449 = vunpack.c.h.b16 %v275
      %v450 = vunpack.c.l.b16 %v276
      %v451 = vunpack.c.h.b16 %v276
      %v452 = vunpack.c.l.b16 %v277
      %v453 = vunpack.c.h.b16 %v277
      %v454 = vunpack.c.l.b16 %v278
      %v455 = vunpack.c.h.b16 %v278
      %v456 = vunpack.c.l.b16 %v279
      %v457 = vunpack.c.h.b16 %v279
      %v458 = vunpack.c.l.b16 %v280
      %v459 = vunpack.c.h.b16 %v280
      %v460 = vunpack.c.l.b16 %v281
      %v461 = vunpack.c.h.b16 %v281
      %v462 = vunpack.c.l.b16 %v282
      %v463 = vunpack.c.h.b16 %v282
      %v464 = vunpack.c.l.b16 %v283
      %v465 = vunpack.c.h.b16 %v283
      %v466 = vunpack.c.l.b16 %v284
      %v467 = vunpack.c.h.b16 %v284
      %v468 = vunpack.c.l.b16 %v285
      %v469 = vunpack.c.h.b16 %v285
      %v470 = vunpack.c.l.b16 %v286
      %v471 = vunpack.c.h.b16 %v286
      %v472 = vunpack.c.l.b16 %v287
      %v473 = vunpack.c.h.b16 %v287
      %v474 = vunpack.c.l.b16 %v288
      %v475 = vunpack.c.h.b16 %v288
      %v476 = vunpack.c.l.b16 %v289
      %v477 = vunpack.c.h.b16 %v289
      %v478 = vunpack.c.l.b16 %v290
      %v479 = vunpack.c.h.b16 %v290
      %v480 = vunpack.c.l.b16 %v291
      %v481 = vunpack.c.h.b16 %v291
      %v482 = vunpack.c.l.b16 %v292
      %v483 = vunpack.c.h.b16 %v292
      %v484 = vunpack.c.l.b16 %v293
      %v485 = vunpack.c.h.b16 %v293
      %v486 = vunpack.c.l.b16 %v294
      %v487 = vunpack.c.h.b16 %v294
      %v488 = vunpack.c.l.b16 %v295
      %v489 = vunpack.c.h.b16 %v295
      %v490 = vunpack.c.l.b16 %v296
      %v491 = vunpack.c.h.b16 %v296
      %v492 = vunpack.c.l.b16 %v297
      %v493 = vunpack.c.h.b16 %v297
      %v494 = vunpack.c.l.b16 %v298
      %v495 = vunpack.c.h.b16 %v298
      %v496 = vunpack.c.l.b16 %v299
      %v497 = vunpack.c.h.b16 %v299
      %v498 = vunpack.c.l.b16 %v300
      %v499 = vunpack.c.h.b16 %v300
      %v500 = vunpack.c.l.b16 %v301
      %v501 = vunpack.c.h.b16 %v301
      %v502 = vunpack.c.l.b16 %v302
      %v503 = vunpack.c.h.b16 %v302
      %v504 = vunpack.c.l.b16 %v303
      %v505 = vunpack.c.h.b16 %v303
      %v506 = vunpack.c.l.b16 %v304
      %v507 = vunpack.c.h.b16 %v304
      %v508 = vunpack.c.l.b16 %v305
      %v509 = vunpack.c.h.b16 %v305
      %v510 = vunpack.c.l.b16 %v306
      %v511 = vunpack.c.h.b16 %v306
      %v512 = vunpack.c.l.b16 %v307
      %v513 = vunpack.c.h.b16 %v307
      %v514 = vunpack.c.l.b16 %v308
      %v515 = vunpack.c.h.b16 %v308
      %v516 = vunpack.c.l.b16 %v309
      %v517 = vunpack.c.h.b16 %v309
      %v518 = vunpack.c.l.b16 %v310
      %v519 = vunpack.c.h.b16 %v310
      %v520 = vunpack.c.l.b16 %v311
      %v521 = vunpack.c.h.b16 %v311
      %v522 = vunpack.c.l.b16 %v312
      %v523 = vunpack.c.h.b16 %v312
      %v524 = vunpack.c.l.b16 %v313
      %v525 = vunpack.c.h.b16 %v313
      %v526 = vunpack.c.l.b16 %v314
      %v527 = vunpack.c.h.b16 %v314
      %v528 = vunpack.c.l.b16 %v315
      %v529 = vunpack.c.h.b16 %v315
      %v530 = vpack.c.b16 %v406, %v402
      %v531 = vpack.c.b16 %v407, %v403
      %v532 = vpack.c.b16 %v408, %v404
      %v533 = vpack.c.b16 %v409, %v405
      %v534 = vpack.c.b16 %v414, %v410
      %v535 = vpack.c.b16 %v415, %v411
      %v536 = vpack.c.b16 %v416, %v412
      %v537 = vpack.c.b16 %v417, %v413
      %v538 = vpack.c.b16 %v422, %v418
      %v539 = vpack.c.b16 %v423, %v419
      %v540 = vpack.c.b16 %v424, %v420
      %v541 = vpack.c.b16 %v425, %v421
      %v542 = vpack.c.b16 %v430, %v426
      %v543 = vpack.c.b16 %v431, %v427
      %v544 = vpack.c.b16 %v432, %v428
      %v545 = vpack.c.b16 %v433, %v429
      %v546 = vpack.c.b16 %v438, %v434
      %v547 = vpack.c.b16 %v439, %v435
      %v548 = vpack.c.b16 %v440, %v436
      %v549 = vpack.c.b16 %v441, %v437
      %v550 = vpack.c.b16 %v446, %v442
      %v551 = vpack.c.b16 %v447, %v443
      %v552 = vpack.c.b16 %v448, %v444
      %v553 = vpack.c.b16 %v449, %v445
      %v554 = vpack.c.b16 %v454, %v450
      %v555 = vpack.c.b16 %v455, %v451
      %v556 = vpack.c.b16 %v456, %v452
      %v557 = vpack.c.b16 %v457, %v453
      %v558 = vpack.c.b16 %v462, %v458
      %v559 = vpack.c.b16 %v463, %v459
      %v560 = vpack.c.b16 %v464, %v460
      %v561 = vpack.c.b16 %v465, %v461
      %v562 = vpack.c.b16 %v470, %v466
      %v563 = vpack.c.b16 %v471, %v467
      %v564 = vpack.c.b16 %v472, %v468
      %v565 = vpack.c.b16 %v473, %v469
      %v566 = vpack.c.b16 %v478, %v474
      %v567 = vpack.c.b16 %v479, %v475
      %v568 = vpack.c.b16 %v480, %v476
      %v569 = vpack.c.b16 %v481, %v477
      %v570 = vpack.c.b16 %v486, %v482
      %v571 = vpack.c.b16 %v487, %v483
      %v572 = vpack.c.b16 %v488, %v484
      %v573 = vpack.c.b16 %v489, %v485
      %v574 = vpack.c.b16 %v494, %v490
      %v575 = vpack.c.b16 %v495, %v491
      %v576 = vpack.c.b16 %v496, %v492
      %v577 = vpack.c.b16 %v497, %v493
      %v578 = vpack.c.b16 %v502, %v498
      %v579 = vpack.c.b16 %v503, %v499
      %v580 = vpack.c.b16 %v504, %v500
      %v581 = vpack.c.b16 %v505, %v501
      %v582 = vpack.c.b16 %v510, %v506
      %v583 = vpack.c.b16 %v511, %v507
      %v584 = vpack.c.b16 %v512, %v508
      %v585 = vpack.c.b16 %v513, %v509
      %v586 = vpack.c.b16 %v518, %v514
      %v587 = vpack.c.b16 %v519, %v515
      %v588 = vpack.c.b16 %v520, %v516
      %v589 = vpack.c.b16 %v521, %v517
      %v590 = vpack.c.b16 %v526, %v522
      %v591 = vpack.c.b16 %v527, %v523
      %v592 = vpack.c.b16 %v528, %v524
      %v593 = vpack.c.b16 %v529, %v525
      %658 = vmatprep.subr.bf16.mxu0 %v559
      %659 = vmatpush1.bf16.msra.mxu0 %v558
      %660 = vmatprep.subr.bf16.mxu0 %v555
      %661 = vmatpush1.bf16.msra.mxu0 %v554
      %662 = vmatprep.subr.bf16.mxu0 %v551
      %663 = vmatpush1.bf16.msra.mxu0 %v550
      %664 = vmatprep.subr.bf16.mxu0 %v547
      %665 = vmatpush1.bf16.msra.mxu0 %v546
      %666 = vmatprep.subr.bf16.mxu0 %v543
      %667 = vmatpush1.bf16.msra.mxu0 %v542
      %668 = vmatprep.subr.bf16.mxu0 %v539
      %669 = vmatpush1.bf16.msra.mxu0 %v538
      %670 = vmatprep.subr.bf16.mxu0 %v535
      %671 = vmatpush1.bf16.msra.mxu0 %v534
      %672 = vmatprep.subr.bf16.mxu0 %v531
      %673 = vmatpush1.bf16.msra.mxu0 %v530
      %674 = vmatprep.subr.bf16.mxu0 %v591
      %675 = vmatpush2.bf16.msra.mxu0 %v590
      %676 = vmatprep.subr.bf16.mxu0 %v587
      %677 = vmatpush2.bf16.msra.mxu0 %v586
      %678 = vmatprep.subr.bf16.mxu0 %v583
      %679 = vmatpush2.bf16.msra.mxu0 %v582
      %680 = vmatprep.subr.bf16.mxu0 %v579
      %681 = vmatpush2.bf16.msra.mxu0 %v578
      %682 = vmatprep.subr.bf16.mxu0 %v575
      %683 = vmatpush2.bf16.msra.mxu0 %v574
      %684 = vmatprep.subr.bf16.mxu0 %v571
      %685 = vmatpush2.bf16.msra.mxu0 %v570
      %686 = vmatprep.subr.bf16.mxu0 %v567
      %687 = vmatpush2.bf16.msra.mxu0 %v566
      %688 = vmatprep.subr.bf16.mxu0 %v563
      %689 = vmatpush2.bf16.msra.mxu0 %v562
      %690 = vmatprep.mubr.bf16.mxu0 %v251
      %691 = vmatmul.mubr.bf16.gmra.mxu0 %v250
      %v692 = vpop.f32.mrf.mxu0
      %v693 = vadd.f32 %v321, %v692
      %v694 = vpop.f32.mrf.mxu0
      %v695 = vadd.f32 %v325, %v694
      %v696 = vpop.f32.mrf.mxu0
      %v697 = vadd.f32 %v321, %v696
      %v698 = vpop.f32.mrf.mxu0
      %v699 = vadd.f32 %v325, %v698
      %700 = vdwg.mxu0
      %701 = vmatprep.subr.bf16.mxu0 %v561
      %702 = vmatpush1.bf16.msra.mxu0 %v560
      %703 = vmatprep.subr.bf16.mxu0 %v557
      %704 = vmatpush1.bf16.msra.mxu0 %v556
      %705 = vmatprep.subr.bf16.mxu0 %v553
      %706 = vmatpush1.bf16.msra.mxu0 %v552
      %707 = vmatprep.subr.bf16.mxu0 %v549
      %708 = vmatpush1.bf16.msra.mxu0 %v548
      %709 = vmatprep.subr.bf16.mxu0 %v545
      %710 = vmatpush1.bf16.msra.mxu0 %v544
      %711 = vmatprep.subr.bf16.mxu0 %v541
      %712 = vmatpush1.bf16.msra.mxu0 %v540
      %713 = vmatprep.subr.bf16.mxu0 %v537
      %714 = vmatpush1.bf16.msra.mxu0 %v536
      %715 = vmatprep.subr.bf16.mxu0 %v533
      %716 = vmatpush1.bf16.msra.mxu0 %v532
      %717 = vmatprep.subr.bf16.mxu0 %v593
      %718 = vmatpush2.bf16.msra.mxu0 %v592
      %719 = vmatprep.subr.bf16.mxu0 %v589
      %720 = vmatpush2.bf16.msra.mxu0 %v588
      %721 = vmatprep.subr.bf16.mxu0 %v585
      %722 = vmatpush2.bf16.msra.mxu0 %v584
      %723 = vmatprep.subr.bf16.mxu0 %v581
      %724 = vmatpush2.bf16.msra.mxu0 %v580
      %725 = vmatprep.subr.bf16.mxu0 %v577
      %726 = vmatpush2.bf16.msra.mxu0 %v576
      %727 = vmatprep.subr.bf16.mxu0 %v573
      %728 = vmatpush2.bf16.msra.mxu0 %v572
      %729 = vmatprep.subr.bf16.mxu0 %v569
      %730 = vmatpush2.bf16.msra.mxu0 %v568
      %731 = vmatprep.subr.bf16.mxu0 %v565
      %732 = vmatpush2.bf16.msra.mxu0 %v564
      %733 = vmatprep.mubr.bf16.mxu0 %v251
      %734 = vmatmul.mubr.bf16.gmra.mxu0 %v250
      %v735 = vpop.f32.mrf.mxu0
      %v736 = vadd.f32 %v329, %v735
      %v737 = vpop.f32.mrf.mxu0
      %v738 = vadd.f32 %v333, %v737
      %v739 = vpop.f32.mrf.mxu0
      %v740 = vadd.f32 %v329, %v739
      %v741 = vpop.f32.mrf.mxu0
      %v742 = vadd.f32 %v333, %v741
      %743 = vdwg.mxu0
      %v744 = vmax.f32 %v693, 0.0
      %v745 = vmax.f32 %v695, 0.0
      %v746 = vmax.f32 %v736, 0.0
      %v747 = vmax.f32 %v738, 0.0
      %v748 = vmax.f32 %v697, 0.0
      %v749 = vmax.f32 %v699, 0.0
      %v750 = vmax.f32 %v740, 0.0
      %v751 = vmax.f32 %v742, 0.0
      %v752 = vpack.c.bf16 %v748, %v744
      %v753 = vpack.c.bf16 %v749, %v745
      %v754 = vpack.c.bf16 %v750, %v746
      %v755 = vpack.c.bf16 %v751, %v747
      %v760 = vunpack.c.l.b16 %v752
      %v761 = vunpack.c.l.b16 %v753
      %v762 = vunpack.c.l.b16 %v754
      %v763 = vunpack.c.l.b16 %v755
      %v764 = vunpack.c.h.b16 %v752
      %v765 = vunpack.c.h.b16 %v753
      %v766 = vunpack.c.h.b16 %v754
      %v767 = vunpack.c.h.b16 %v755
      %v768 = vpack.c.b16 %v761, %v760
      %v769 = vpack.c.b16 %v763, %v762
      %v770 = vpack.c.b16 %v765, %v764
      %v771 = vpack.c.b16 %v767, %v766
      %776 = vst [vmem:[#allocation2] sm:$0xff] %v768
      %777 = vst [vmem:[#allocation2 + $0x8] sm:$0xff] %v769
      %778 = vst [vmem:[#allocation2 + $0x10] sm:$0xff] %v770
      %779 = vst [vmem:[#allocation2 + $0x18] sm:$0xff] %v771
    $region49: #{tpu_custom_call.1} parent=1 // pred_fallthru
      _
    %v780 = vld [vmem:[#allocation2] sm:$0xff]
    %v781 = vld [vmem:[#allocation2 + $0x8] sm:$0xff]
    %v782 = vld [vmem:[#allocation2 + $0x10] sm:$0xff]
    %v783 = vld [vmem:[#allocation2 + $0x18] sm:$0xff]
    %v784 = vld [vmem:[#allocation9] sm:$0xf]
    %v785 = vld [vmem:[#allocation9 + $0x4] sm:$0xf]
    %v786 = vld [vmem:[#allocation9 + $0x8] sm:$0xf]
    %v787 = vld [vmem:[#allocation9 + $0xc] sm:$0xf]
    %v788 = vld [vmem:[#allocation9 + $0x10] sm:$0xf]
    %v789 = vld [vmem:[#allocation9 + $0x14] sm:$0xf]
    %v790 = vld [vmem:[#allocation9 + $0x18] sm:$0xf]
    %v791 = vld [vmem:[#allocation9 + $0x1c] sm:$0xf]
    %v792 = vld [vmem:[#allocation9 + $0x20] sm:$0xf]
    %v793 = vld [vmem:[#allocation9 + $0x24] sm:$0xf]
    %v794 = vld [vmem:[#allocation9 + $0x28] sm:$0xf]
    %v795 = vld [vmem:[#allocation9 + $0x2c] sm:$0xf]
    %v796 = vld [vmem:[#allocation9 + $0x30] sm:$0xf]
    %v797 = vld [vmem:[#allocation9 + $0x34] sm:$0xf]
    %v798 = vld [vmem:[#allocation9 + $0x38] sm:$0xf]
    %v799 = vld [vmem:[#allocation9 + $0x3c] sm:$0xf]
    %v800 = vld [vmem:[#allocation9 + $0x40] sm:$0xf]
    %v801 = vld [vmem:[#allocation9 + $0x44] sm:$0xf]
    %v802 = vld [vmem:[#allocation9 + $0x48] sm:$0xf]
    %v803 = vld [vmem:[#allocation9 + $0x4c] sm:$0xf]
    %v804 = vld [vmem:[#allocation9 + $0x50] sm:$0xf]
    %v805 = vld [vmem:[#allocation9 + $0x54] sm:$0xf]
    %v806 = vld [vmem:[#allocation9 + $0x58] sm:$0xf]
    %v807 = vld [vmem:[#allocation9 + $0x5c] sm:$0xf]
    %v808 = vld [vmem:[#allocation9 + $0x60] sm:$0xf]
    %v809 = vld [vmem:[#allocation9 + $0x64] sm:$0xf]
    %v810 = vld [vmem:[#allocation9 + $0x68] sm:$0xf]
    %v811 = vld [vmem:[#allocation9 + $0x6c] sm:$0xf]
    %v812 = vld [vmem:[#allocation9 + $0x70] sm:$0xf]
    %v813 = vld [vmem:[#allocation9 + $0x74] sm:$0xf]
    %v814 = vld [vmem:[#allocation9 + $0x78] sm:$0xf]
    %v815 = vld [vmem:[#allocation9 + $0x7c] sm:$0xf]
    %v816 = vld [vmem:[#allocation9 + $0x80] sm:$0xf]
    %v817 = vld [vmem:[#allocation9 + $0x84] sm:$0xf]
    %v818 = vld [vmem:[#allocation9 + $0x88] sm:$0xf]
    %v819 = vld [vmem:[#allocation9 + $0x8c] sm:$0xf]
    %v820 = vld [vmem:[#allocation9 + $0x90] sm:$0xf]
    %v821 = vld [vmem:[#allocation9 + $0x94] sm:$0xf]
    %v822 = vld [vmem:[#allocation9 + $0x98] sm:$0xf]
    %v823 = vld [vmem:[#allocation9 + $0x9c] sm:$0xf]
    %v824 = vld [vmem:[#allocation9 + $0xa0] sm:$0xf]
    %v825 = vld [vmem:[#allocation9 + $0xa4] sm:$0xf]
    %v826 = vld [vmem:[#allocation9 + $0xa8] sm:$0xf]
    %v827 = vld [vmem:[#allocation9 + $0xac] sm:$0xf]
    %v828 = vld [vmem:[#allocation9 + $0xb0] sm:$0xf]
    %v829 = vld [vmem:[#allocation9 + $0xb4] sm:$0xf]
    %v830 = vld [vmem:[#allocation9 + $0xb8] sm:$0xf]
    %v831 = vld [vmem:[#allocation9 + $0xbc] sm:$0xf]
    %v832 = vld [vmem:[#allocation9 + $0xc0] sm:$0xf]
    %v833 = vld [vmem:[#allocation9 + $0xc4] sm:$0xf]
    %v834 = vld [vmem:[#allocation9 + $0xc8] sm:$0xf]
    %v835 = vld [vmem:[#allocation9 + $0xcc] sm:$0xf]
    %v836 = vld [vmem:[#allocation9 + $0xd0] sm:$0xf]
    %v837 = vld [vmem:[#allocation9 + $0xd4] sm:$0xf]
    %v838 = vld [vmem:[#allocation9 + $0xd8] sm:$0xf]
    %v839 = vld [vmem:[#allocation9 + $0xdc] sm:$0xf]
    %v840 = vld [vmem:[#allocation9 + $0xe0] sm:$0xf]
    %v841 = vld [vmem:[#allocation9 + $0xe4] sm:$0xf]
    %v842 = vld [vmem:[#allocation9 + $0xe8] sm:$0xf]
    %v843 = vld [vmem:[#allocation9 + $0xec] sm:$0xf]
    %v844 = vld [vmem:[#allocation9 + $0xf0] sm:$0xf]
    %v845 = vld [vmem:[#allocation9 + $0xf4] sm:$0xf]
    %v846 = vld [vmem:[#allocation9 + $0xf8] sm:$0xf]
    %v847 = vld [vmem:[#allocation9 + $0xfc] sm:$0xf]
    %v848 = vld [vmem:[%s6] sm:$0x1]
    %v850 = vlaneseq
    %v851 = vshrl.u32 %v850, 7
    %v852 = vsub.s32 0, %v851
    %v853 = vrot.slane %v848, %v852
    %v859 = vunpack.c.l.b16 %v780
    %v860 = vunpack.c.h.b16 %v780
    %v861 = vunpack.c.l.b16 %v781
    %v862 = vunpack.c.h.b16 %v781
    %v863 = vunpack.c.l.b16 %v782
    %v864 = vunpack.c.h.b16 %v782
    %v865 = vunpack.c.l.b16 %v783
    %v866 = vunpack.c.h.b16 %v783
    %v867 = vpack.c.b16 %v863, %v859
    %v868 = vpack.c.b16 %v864, %v860
    %v869 = vpack.c.b16 %v865, %v861
    %v870 = vpack.c.b16 %v866, %v862
    %v939 = vunpack.c.l.b16 %v784
    %v940 = vunpack.c.l.b16 %v785
    %v941 = vunpack.c.l.b16 %v786
    %v942 = vunpack.c.l.b16 %v787
    %v943 = vunpack.c.l.b16 %v788
    %v944 = vunpack.c.l.b16 %v789
    %v945 = vunpack.c.l.b16 %v790
    %v946 = vunpack.c.l.b16 %v791
    %v947 = vunpack.c.l.b16 %v792
    %v948 = vunpack.c.l.b16 %v793
    %v949 = vunpack.c.l.b16 %v794
    %v950 = vunpack.c.l.b16 %v795
    %v951 = vunpack.c.l.b16 %v796
    %v952 = vunpack.c.l.b16 %v797
    %v953 = vunpack.c.l.b16 %v798
    %v954 = vunpack.c.l.b16 %v799
    %v955 = vunpack.c.l.b16 %v800
    %v956 = vunpack.c.l.b16 %v801
    %v957 = vunpack.c.l.b16 %v802
    %v958 = vunpack.c.l.b16 %v803
    %v959 = vunpack.c.l.b16 %v804
    %v960 = vunpack.c.l.b16 %v805
    %v961 = vunpack.c.l.b16 %v806
    %v962 = vunpack.c.l.b16 %v807
    %v963 = vunpack.c.l.b16 %v808
    %v964 = vunpack.c.l.b16 %v809
    %v965 = vunpack.c.l.b16 %v810
    %v966 = vunpack.c.l.b16 %v811
    %v967 = vunpack.c.l.b16 %v812
    %v968 = vunpack.c.l.b16 %v813
    %v969 = vunpack.c.l.b16 %v814
    %v970 = vunpack.c.l.b16 %v815
    %v971 = vunpack.c.l.b16 %v816
    %v972 = vunpack.c.l.b16 %v817
    %v973 = vunpack.c.l.b16 %v818
    %v974 = vunpack.c.l.b16 %v819
    %v975 = vunpack.c.l.b16 %v820
    %v976 = vunpack.c.l.b16 %v821
    %v977 = vunpack.c.l.b16 %v822
    %v978 = vunpack.c.l.b16 %v823
    %v979 = vunpack.c.l.b16 %v824
    %v980 = vunpack.c.l.b16 %v825
    %v981 = vunpack.c.l.b16 %v826
    %v982 = vunpack.c.l.b16 %v827
    %v983 = vunpack.c.l.b16 %v828
    %v984 = vunpack.c.l.b16 %v829
    %v985 = vunpack.c.l.b16 %v830
    %v986 = vunpack.c.l.b16 %v831
    %v987 = vunpack.c.l.b16 %v832
    %v988 = vunpack.c.l.b16 %v833
    %v989 = vunpack.c.l.b16 %v834
    %v990 = vunpack.c.l.b16 %v835
    %v991 = vunpack.c.l.b16 %v836
    %v992 = vunpack.c.l.b16 %v837
    %v993 = vunpack.c.l.b16 %v838
    %v994 = vunpack.c.l.b16 %v839
    %v995 = vunpack.c.l.b16 %v840
    %v996 = vunpack.c.l.b16 %v841
    %v997 = vunpack.c.l.b16 %v842
    %v998 = vunpack.c.l.b16 %v843
    %v999 = vunpack.c.l.b16 %v844
    %v1000 = vunpack.c.l.b16 %v845
    %v1001 = vunpack.c.l.b16 %v846
    %v1002 = vunpack.c.l.b16 %v847
    %v1003 = vpack.c.b16 %v940, %v939
    %v1004 = vpack.c.b16 %v942, %v941
    %v1005 = vpack.c.b16 %v944, %v943
    %v1006 = vpack.c.b16 %v946, %v945
    %v1007 = vpack.c.b16 %v948, %v947
    %v1008 = vpack.c.b16 %v950, %v949
    %v1009 = vpack.c.b16 %v952, %v951
    %v1010 = vpack.c.b16 %v954, %v953
    %v1011 = vpack.c.b16 %v956, %v955
    %v1012 = vpack.c.b16 %v958, %v957
    %v1013 = vpack.c.b16 %v960, %v959
    %v1014 = vpack.c.b16 %v962, %v961
    %v1015 = vpack.c.b16 %v964, %v963
    %v1016 = vpack.c.b16 %v966, %v965
    %v1017 = vpack.c.b16 %v968, %v967
    %v1018 = vpack.c.b16 %v970, %v969
    %v1019 = vpack.c.b16 %v972, %v971
    %v1020 = vpack.c.b16 %v974, %v973
    %v1021 = vpack.c.b16 %v976, %v975
    %v1022 = vpack.c.b16 %v978, %v977
    %v1023 = vpack.c.b16 %v980, %v979
    %v1024 = vpack.c.b16 %v982, %v981
    %v1025 = vpack.c.b16 %v984, %v983
    %v1026 = vpack.c.b16 %v986, %v985
    %v1027 = vpack.c.b16 %v988, %v987
    %v1028 = vpack.c.b16 %v990, %v989
    %v1029 = vpack.c.b16 %v992, %v991
    %v1030 = vpack.c.b16 %v994, %v993
    %v1031 = vpack.c.b16 %v996, %v995
    %v1032 = vpack.c.b16 %v998, %v997
    %v1033 = vpack.c.b16 %v1000, %v999
    %v1034 = vpack.c.b16 %v1002, %v1001
    %1067 = vmatprep.subr.bf16.mxu0 0
    %1068 = vmatpush1.bf16.msra.mxu0 %v1010
    %1069 = vmatprep.subr.bf16.mxu0 0
    %1070 = vmatpush1.bf16.msra.mxu0 %v1009
    %1071 = vmatprep.subr.bf16.mxu0 0
    %1072 = vmatpush1.bf16.msra.mxu0 %v1008
    %1073 = vmatprep.subr.bf16.mxu0 0
    %1074 = vmatpush1.bf16.msra.mxu0 %v1007
    %1075 = vmatprep.subr.bf16.mxu0 0
    %1076 = vmatpush1.bf16.msra.mxu0 %v1006
    %1077 = vmatprep.subr.bf16.mxu0 0
    %1078 = vmatpush1.bf16.msra.mxu0 %v1005
    %1079 = vmatprep.subr.bf16.mxu0 0
    %1080 = vmatpush1.bf16.msra.mxu0 %v1004
    %1081 = vmatprep.subr.bf16.mxu0 0
    %1082 = vmatpush1.bf16.msra.mxu0 %v1003
    %1083 = vmatprep.subr.bf16.mxu0 0
    %1084 = vmatpush2.bf16.msra.mxu0 %v1018
    %1085 = vmatprep.subr.bf16.mxu0 0
    %1086 = vmatpush2.bf16.msra.mxu0 %v1017
    %1087 = vmatprep.subr.bf16.mxu0 0
    %1088 = vmatpush2.bf16.msra.mxu0 %v1016
    %1089 = vmatprep.subr.bf16.mxu0 0
    %1090 = vmatpush2.bf16.msra.mxu0 %v1015
    %1091 = vmatprep.subr.bf16.mxu0 0
    %1092 = vmatpush2.bf16.msra.mxu0 %v1014
    %1093 = vmatprep.subr.bf16.mxu0 0
    %1094 = vmatpush2.bf16.msra.mxu0 %v1013
    %1095 = vmatprep.subr.bf16.mxu0 0
    %1096 = vmatpush2.bf16.msra.mxu0 %v1012
    %1097 = vmatprep.subr.bf16.mxu0 0
    %1098 = vmatpush2.bf16.msra.mxu0 %v1011
    %1099 = vmatprep.mubr.bf16.mxu0 %v868
    %1100 = vmatmul.mubr.bf16.gmra.mxu0 %v867
    %v1101 = vpop.f32.mrf.mxu0
    %v1102 = vadd.f32 %v853, %v1101
    %v1103 = vpop.f32.mrf.mxu0
    %v1104 = vpop.f32.mrf.mxu0
    %v1105 = vadd.f32 %v853, %v1104
    %v1106 = vpop.f32.mrf.mxu0
    %1107 = vdwg.mxu0
    %1108 = vmatprep.subr.bf16.mxu0 0
    %1109 = vmatpush1.bf16.msra.mxu0 %v1026
    %1110 = vmatprep.subr.bf16.mxu0 0
    %1111 = vmatpush1.bf16.msra.mxu0 %v1025
    %1112 = vmatprep.subr.bf16.mxu0 0
    %1113 = vmatpush1.bf16.msra.mxu0 %v1024
    %1114 = vmatprep.subr.bf16.mxu0 0
    %1115 = vmatpush1.bf16.msra.mxu0 %v1023
    %1116 = vmatprep.subr.bf16.mxu0 0
    %1117 = vmatpush1.bf16.msra.mxu0 %v1022
    %1118 = vmatprep.subr.bf16.mxu0 0
    %1119 = vmatpush1.bf16.msra.mxu0 %v1021
    %1120 = vmatprep.subr.bf16.mxu0 0
    %1121 = vmatpush1.bf16.msra.mxu0 %v1020
    %1122 = vmatprep.subr.bf16.mxu0 0
    %1123 = vmatpush1.bf16.msra.mxu0 %v1019
    %1124 = vmatprep.subr.bf16.mxu0 0
    %1125 = vmatpush2.bf16.msra.mxu0 %v1034
    %1126 = vmatprep.subr.bf16.mxu0 0
    %1127 = vmatpush2.bf16.msra.mxu0 %v1033
    %1128 = vmatprep.subr.bf16.mxu0 0
    %1129 = vmatpush2.bf16.msra.mxu0 %v1032
    %1130 = vmatprep.subr.bf16.mxu0 0
    %1131 = vmatpush2.bf16.msra.mxu0 %v1031
    %1132 = vmatprep.subr.bf16.mxu0 0
    %1133 = vmatpush2.bf16.msra.mxu0 %v1030
    %1134 = vmatprep.subr.bf16.mxu0 0
    %1135 = vmatpush2.bf16.msra.mxu0 %v1029
    %1136 = vmatprep.subr.bf16.mxu0 0
    %1137 = vmatpush2.bf16.msra.mxu0 %v1028
    %1138 = vmatprep.subr.bf16.mxu0 0
    %1139 = vmatpush2.bf16.msra.mxu0 %v1027
    %1140 = vmatprep.mubr.bf16.mxu0 %v870
    %1141 = vmatmul.mubr.bf16.gmra.mxu0 %v869
    %v1142 = vpop.f32.mrf.mxu0
    %v1143 = vadd.f32 %v1102, %v1142
    %v1144 = vpop.f32.mrf.mxu0
    %v1145 = vpop.f32.mrf.mxu0
    %v1146 = vadd.f32 %v1105, %v1145
    %v1147 = vpop.f32.mrf.mxu0
    %1148 = vdwg.mxu0
    %1149 = vst [vmem:[#allocation11] sm:$0xff] %v1143
    %1150 = vst [vmem:[#allocation11 + $0x8] sm:$0xff] %v1146
    // Predicated region
    $region50: #{tpu_custom_call.1} parent=1 // pred_check
      _
    $region51: #{tpu_custom_call.1} parent=1 // pred_check_branch
      %1152 = sbr.rel (0) target = $region53
    $region52: #{tpu_custom_call.1} parent=1 // pred_region
      %s1154 = ssub.s32 256, 256
      %1155 = vsyncadd [#allocation5], %s1154
      %s1156 = sshll.u32 [#allocation11], 4
      %s1157 = int_to_ptr.vmem [resolvable:$true] %s1156
      %1162 = dma.vmem_to_hbm [thread:$0]  %s1157, 256, %s7, [#allocation5], 128, 128, 8
    $region53: #{tpu_custom_call.1} parent=1 // pred_fallthru
      _
    // Predicated region
    $region54: #{tpu_custom_call.1} parent=1 // pred_check
      _
    $region55: #{tpu_custom_call.1} parent=1 // pred_check_branch
      %1164 = sbr.rel (0) target = $region57
    $region56: #{tpu_custom_call.1} parent=1 // pred_region
      %1165 = dma.done [#allocation5], 256
    $region57: #{tpu_custom_call.1} parent=1 // pred_fallthru
      _
    %1166 = vsyncpa [#allocation4], 1
    %1167 = vsyncpa [#allocation7], 1
    %1168 = vsyncpa [#allocation10], 1
    %1169 = vsyncpa [#allocation5], 1

// kernel: tpu_custom_call.1
$region0: #{tpu_custom_call.1}
  #allocation0 [shape = 'u32[]', space=smem, size = 0x4, offset = 0x4, fixed_abs, tag = 'smem constant byte address 0x4 - core index']
  #allocation1 [shape = 'u32[144,128]{1,0:T(1,128)}', space=vmem, size = 0x12000, scoped, tag = 'internal scratch']
  #allocation2 [shape = 'bf16[16,512]{1,0:T(8,128)(2,1)}', space=vmem, size = 0x4000, scoped, tag = 'scratch operand']
  %s0 = inlined_call_operand.hbm [shape: bf16[16,128], index: 0, kind: input, shape index: {}]
  %s1 = inlined_call_operand.hbm [shape: bf16[128,256], index: 1, kind: input, shape index: {}]
  %s2 = inlined_call_operand.vmem [shape: f32[1,256], index: 2, kind: input, shape index: {}]
  %s3 = inlined_call_operand.hbm [shape: bf16[256,512], index: 3, kind: input, shape index: {}]
  %s4 = inlined_call_operand.vmem [shape: f32[1,512], index: 4, kind: input, shape index: {}]
  %s5 = inlined_call_operand.hbm [shape: bf16[512,128], index: 5, kind: input, shape index: {}]
  %s6 = inlined_call_operand.vmem [shape: f32[1,128], index: 6, kind: input, shape index: {}]
  %s7 = inlined_call_operand.hbm [shape: f32[16,128], index: 7, kind: output, shape index: {}]
  %s8 = sld [smem:[#allocation0]]
  $region58: #{tpu_custom_call.1} parent=0
    _
  %s10 = ssub.s32 1, %s8
  %s11 = scalar_select 0, %s10, %s8
  $region1: #{tpu_custom_call.1} parent=0
    #allocation3 [shape = 'u8[4096]{0}', space=vmem, size = 0x1000, scoped, tag = 'input window, operand 0, single buffered']
    #allocation4 [shape = 's32[1]{0}', space=sflag, size = 0x4, scoped, tag = 'scoped memory for tpu_custom_call.1']
    #allocation5 [shape = 's32[1]{0}', space=sflag, size = 0x4, scoped, tag = 'scoped memory for tpu_custom_call.1']
    #allocation6 [shape = 'u8[65536]{0}', space=vmem, size = 0x10000, scoped, tag = 'input window, operand 1, single buffered']
    #allocation7 [shape = 's32[1]{0}', space=sflag, size = 0x4, scoped, tag = 'scoped memory for tpu_custom_call.1']
    #allocation8 [shape = 'u8[262144]{0}', space=vmem, size = 0x40000, scoped, tag = 'input window, operand 3, single buffered']
    #allocation9 [shape = 'u8[131072]{0}', space=vmem, size = 0x20000, scoped, tag = 'input window, operand 5, single buffered']
    #allocation10 [shape = 's32[1]{0}', space=sflag, size = 0x4, scoped, tag = 'scoped memory for tpu_custom_call.1']
    #allocation11 [shape = 'u8[8192]{0}', space=vmem, size = 0x2000, scoped, tag = 'output window, operand 0, single buffered']
    %12 = vsyncpa [#allocation4], 0
    %13 = vsyncpa [#allocation7], 0
    %14 = vsyncpa [#allocation10], 0
    %15 = vsyncpa [#allocation5], 0
    // Predicated region
    $region2: #{tpu_custom_call.1} parent=1 // pred_check
      _
    $region3: #{tpu_custom_call.1} parent=1 // pred_check_branch
      %17 = sbr.rel (0) target = $region5
    $region4: #{tpu_custom_call.1} parent=1 // pred_region
      %s19 = ssub.s32 128, 128
      %20 = vsyncadd [#allocation4], %s19
      %s21 = sshll.u32 [#allocation3], 4
      %s22 = int_to_ptr.vmem [resolvable:$true] %s21
      %27 = dma.hbm_to_vmem [thread:$0]  %s0, 128, %s22, [#allocation4], 64, 64, 4
    $region5: #{tpu_custom_call.1} parent=1 // pred_fallthru
      _
    // Predicated region
    $region6: #{tpu_custom_call.1} parent=1 // pred_check
      _
    $region7: #{tpu_custom_call.1} parent=1 // pred_check_branch
      %29 = sbr.rel (0) target = $region9
    $region8: #{tpu_custom_call.1} parent=1 // pred_region
      %s31 = ssub.s32 2048, 2048
      %32 = vsyncadd [#allocation7], %s31
      %s33 = sshll.u32 [#allocation6], 4
      %s34 = int_to_ptr.vmem [resolvable:$true] %s33
      %39 = dma.hbm_to_vmem [thread:$0]  %s1, 2048, %s34, [#allocation7], 128, 128, 8
    $region9: #{tpu_custom_call.1} parent=1 // pred_fallthru
      _
    // Predicated region
    $region10: #{tpu_custom_call.1} parent=1 // pred_check
      _
    $region11: #{tpu_custom_call.1} parent=1 // pred_check_branch
      %41 = sbr.rel (0) target = $region13
    $region12: #{tpu_custom_call.1} parent=1 // pred_region
      _
    $region13: #{tpu_custom_call.1} parent=1 // pred_fallthru
      _
    // Predicated region
    $region14: #{tpu_custom_call.1} parent=1 // pred_check
      _
    $region15: #{tpu_custom_call.1} parent=1 // pred_check_branch
      %43 = sbr.rel (0) target = $region17
    $region16: #{tpu_custom_call.1} parent=1 // pred_region
      %s45 = ssub.s32 8192, 8192
      %46 = vsyncadd [#allocation7], %s45
      %s47 = sshll.u32 [#allocation8], 4
      %s48 = int_to_ptr.vmem [resolvable:$true] %s47
      %53 = dma.hbm_to_vmem [thread:$0]  %s3, 8192, %s48, [#allocation7], 256, 256, 16
    $region17: #{tpu_custom_call.1} parent=1 // pred_fallthru
      _
    // Predicated region
    $region18: #{tpu_custom_call.1} parent=1 // pred_check
      _
    $region19: #{tpu_custom_call.1} parent=1 // pred_check_branch
      %55 = sbr.rel (0) target = $region21
    $region20: #{tpu_custom_call.1} parent=1 // pred_region
      _
    $region21: #{tpu_custom_call.1} parent=1 // pred_fallthru
      _
    // Predicated region
    $region22: #{tpu_custom_call.1} parent=1 // pred_check
      _
    $region23: #{tpu_custom_call.1} parent=1 // pred_check_branch
      %57 = sbr.rel (0) target = $region25
    $region24: #{tpu_custom_call.1} parent=1 // pred_region
      %s59 = ssub.s32 4096, 4096
      %60 = vsyncadd [#allocation10], %s59
      %s61 = sshll.u32 [#allocation9], 4
      %s62 = int_to_ptr.vmem [resolvable:$true] %s61
      %67 = dma.hbm_to_vmem [thread:$0]  %s5, 4096, %s62, [#allocation10], 64, 64, 4
    $region25: #{tpu_custom_call.1} parent=1 // pred_fallthru
      _
    // Predicated region
    $region26: #{tpu_custom_call.1} parent=1 // pred_check
      _
    $region27: #{tpu_custom_call.1} parent=1 // pred_check_branch
      %69 = sbr.rel (0) target = $region29
    $region28: #{tpu_custom_call.1} parent=1 // pred_region
      _
    $region29: #{tpu_custom_call.1} parent=1 // pred_fallthru
      _
    // Predicated region
    $region30: #{tpu_custom_call.1} parent=1 // pred_check
      _
    $region31: #{tpu_custom_call.1} parent=1 // pred_check_branch
      %71 = sbr.rel (0) target = $region33
    $region32: #{tpu_custom_call.1} parent=1 // pred_region
      %72 = dma.done [#allocation4], 128
    $region33: #{tpu_custom_call.1} parent=1 // pred_fallthru
      _
    // Predicated region
    $region34: #{tpu_custom_call.1} parent=1 // pred_check
      _
    $region35: #{tpu_custom_call.1} parent=1 // pred_check_branch
      %74 = sbr.rel (0) target = $region37
    $region36: #{tpu_custom_call.1} parent=1 // pred_region
      %75 = dma.done [#allocation7], 2048
    $region37: #{tpu_custom_call.1} parent=1 // pred_fallthru
      _
    // Predicated region
    $region38: #{tpu_custom_call.1} parent=1 // pred_check
      _
    $region39: #{tpu_custom_call.1} parent=1 // pred_check_branch
      %77 = sbr.rel (0) target = $region41
    $region40: #{tpu_custom_call.1} parent=1 // pred_region
      %78 = dma.done [#allocation7], 8192
    $region41: #{tpu_custom_call.1} parent=1 // pred_fallthru
      _
    // Predicated region
    $region42: #{tpu_custom_call.1} parent=1 // pred_check
      _
    $region43: #{tpu_custom_call.1} parent=1 // pred_check_branch
      %80 = sbr.rel (0) target = $region45
    $region44: #{tpu_custom_call.1} parent=1 // pred_region
      %81 = dma.done [#allocation10], 4096
    $region45: #{tpu_custom_call.1} parent=1 // pred_fallthru
      _
    %p83 = scmp.eq.s32.totalorder 0, 0
    // Predicated region
    $region46: #{tpu_custom_call.1} parent=1 // pred_check
      %p84 = pneg %p83
    $region47: #{tpu_custom_call.1} parent=1 // pred_check_branch
      %86 = sbr.rel (%p84) target = $region49
    $region48: #{tpu_custom_call.1} parent=1 // pred_region
      %v87 = vld [vmem:[#allocation3] sm:$0xf]
      %v88 = vld [vmem:[#allocation3 + $0x4] sm:$0xf]
      %v89 = vld [vmem:[#allocation6] sm:$0xff]
      %v90 = vld [vmem:[#allocation6 + $0x8] sm:$0xff]
      %v91 = vld [vmem:[#allocation6 + $0x10] sm:$0xff]
      %v92 = vld [vmem:[#allocation6 + $0x18] sm:$0xff]
      %v93 = vld [vmem:[#allocation6 + $0x20] sm:$0xff]
      %v94 = vld [vmem:[#allocation6 + $0x28] sm:$0xff]
      %v95 = vld [vmem:[#allocation6 + $0x30] sm:$0xff]
      %v96 = vld [vmem:[#allocation6 + $0x38] sm:$0xff]
      %v97 = vld [vmem:[#allocation6 + $0x40] sm:$0xff]
      %v98 = vld [vmem:[#allocation6 + $0x48] sm:$0xff]
      %v99 = vld [vmem:[#allocation6 + $0x50] sm:$0xff]
      %v100 = vld [vmem:[#allocation6 + $0x58] sm:$0xff]
      %v101 = vld [vmem:[#allocation6 + $0x60] sm:$0xff]
      %v102 = vld [vmem:[#allocation6 + $0x68] sm:$0xff]
      %v103 = vld [vmem:[#allocation6 + $0x70] sm:$0xff]
      %v104 = vld [vmem:[#allocation6 + $0x78] sm:$0xff]
      %v105 = vld [vmem:[%s2] sm:$0x3]
      %v107 = vlaneseq
      %v108 = vshrl.u32 %v107, 7
      %v109 = vsub.s32 0, %v108
      %v110 = vrot.slane %v105, %v109
      %v111 = vlaneseq
      %v112 = vshrl.u32 %v111, 7
      %v113 = vsub.s32 1, %v112
      %v114 = vrot.slane %v105, %v113
      %v119 = vunpack.c.l.b16 %v87
      %v120 = vunpack.c.l.b16 %v88
      %v121 = vpack.c.b16 %v120, %v119
      %v139 = vunpack.c.l.b16 %v89
      %v140 = vunpack.c.h.b16 %v89
      %v141 = vunpack.c.l.b16 %v90
      %v142 = vunpack.c.h.b16 %v90
      %v143 = vunpack.c.l.b16 %v91
      %v144 = vunpack.c.h.b16 %v91
      %v145 = vunpack.c.l.b16 %v92
      %v146 = vunpack.c.h.b16 %v92
      %v147 = vunpack.c.l.b16 %v93
      %v148 = vunpack.c.h.b16 %v93
      %v149 = vunpack.c.l.b16 %v94
      %v150 = vunpack.c.h.b16 %v94
      %v151 = vunpack.c.l.b16 %v95
      %v152 = vunpack.c.h.b16 %v95
      %v153 = vunpack.c.l.b16 %v96
      %v154 = vunpack.c.h.b16 %v96
      %v155 = vunpack.c.l.b16 %v97
      %v156 = vunpack.c.h.b16 %v97
      %v157 = vunpack.c.l.b16 %v98
      %v158 = vunpack.c.h.b16 %v98
      %v159 = vunpack.c.l.b16 %v99
      %v160 = vunpack.c.h.b16 %v99
      %v161 = vunpack.c.l.b16 %v100
      %v162 = vunpack.c.h.b16 %v100
      %v163 = vunpack.c.l.b16 %v101
      %v164 = vunpack.c.h.b16 %v101
      %v165 = vunpack.c.l.b16 %v102
      %v166 = vunpack.c.h.b16 %v102
      %v167 = vunpack.c.l.b16 %v103
      %v168 = vunpack.c.h.b16 %v103
      %v169 = vunpack.c.l.b16 %v104
      %v170 = vunpack.c.h.b16 %v104
      %v171 = vpack.c.b16 %v141, %v139
      %v172 = vpack.c.b16 %v142, %v140
      %v173 = vpack.c.b16 %v145, %v143
      %v174 = vpack.c.b16 %v146, %v144
      %v175 = vpack.c.b16 %v149, %v147
      %v176 = vpack.c.b16 %v150, %v148
      %v177 = vpack.c.b16 %v153, %v151
      %v178 = vpack.c.b16 %v154, %v152
      %v179 = vpack.c.b16 %v157, %v155
      %v180 = vpack.c.b16 %v158, %v156
      %v181 = vpack.c.b16 %v161, %v159
      %v182 = vpack.c.b16 %v162, %v160
      %v183 = vpack.c.b16 %v165, %v163
      %v184 = vpack.c.b16 %v166, %v164
      %v185 = vpack.c.b16 %v169, %v167
      %v186 = vpack.c.b16 %v170, %v168
      %203 = vmatprep.subr.bf16.mxu0 %v186
      %204 = vmatpush1.bf16.msra.mxu0 %v185
      %205 = vmatprep.subr.bf16.mxu0 %v184
      %206 = vmatpush1.bf16.msra.mxu0 %v183
      %207 = vmatprep.subr.bf16.mxu0 %v182
      %208 = vmatpush1.bf16.msra.mxu0 %v181
      %209 = vmatprep.subr.bf16.mxu0 %v180
      %210 = vmatpush1.bf16.msra.mxu0 %v179
      %211 = vmatprep.subr.bf16.mxu0 %v178
      %212 = vmatpush1.bf16.msra.mxu0 %v177
      %213 = vmatprep.subr.bf16.mxu0 %v176
      %214 = vmatpush1.bf16.msra.mxu0 %v175
      %215 = vmatprep.subr.bf16.mxu0 %v174
      %216 = vmatpush1.bf16.msra.mxu0 %v173
      %217 = vmatprep.subr.bf16.mxu0 %v172
      %218 = vmatpush1.bf16.msra.mxu0 %v171
      %219 = vmatprep.subr.bf16.mxu0 0
      %220 = vmatpush2.bf16.msra.mxu0 0
      %221 = vmatprep.subr.bf16.mxu0 0
      %222 = vmatpush2.bf16.msra.mxu0 0
      %223 = vmatprep.subr.bf16.mxu0 0
      %224 = vmatpush2.bf16.msra.mxu0 0
      %225 = vmatprep.subr.bf16.mxu0 0
      %226 = vmatpush2.bf16.msra.mxu0 0
      %227 = vmatprep.subr.bf16.mxu0 0
      %228 = vmatpush2.bf16.msra.mxu0 0
      %229 = vmatprep.subr.bf16.mxu0 0
      %230 = vmatpush2.bf16.msra.mxu0 0
      %231 = vmatprep.subr.bf16.mxu0 0
      %232 = vmatpush2.bf16.msra.mxu0 0
      %233 = vmatprep.subr.bf16.mxu0 0
      %234 = vmatpush2.bf16.msra.mxu0 0
      %235 = vmatprep.mubr.bf16.mxu0 0
      %236 = vmatmul.mubr.bf16.gmra.mxu0 %v121
      %v237 = vpop.f32.mrf.mxu0
      %v238 = vadd.f32 %v110, %v237
      %v239 = vpop.f32.mrf.mxu0
      %v240 = vadd.f32 %v114, %v239
      %v241 = vpop.f32.mrf.mxu0
      %v242 = vadd.f32 %v110, %v241
      %v243 = vpop.f32.mrf.mxu0
      %v244 = vadd.f32 %v114, %v243
      %245 = vdwg.mxu0
      %v246 = vmax.f32 %v238, 0.0
      %v247 = vmax.f32 %v240, 0.0
      %v248 = vmax.f32 %v242, 0.0
      %v249 = vmax.f32 %v244, 0.0
      %v250 = vpack.c.bf16 %v248, %v246
      %v251 = vpack.c.bf16 %v249, %v247
      %v252 = vld [vmem:[#allocation8] sm:$0xff]
      %v253 = vld [vmem:[#allocation8 + $0x8] sm:$0xff]
      %v254 = vld [vmem:[#allocation8 + $0x10] sm:$0xff]
      %v255 = vld [vmem:[#allocation8 + $0x18] sm:$0xff]
      %v256 = vld [vmem:[#allocation8 + $0x20] sm:$0xff]
      %v257 = vld [vmem:[#allocation8 + $0x28] sm:$0xff]
      %v258 = vld [vmem:[#allocation8 + $0x30] sm:$0xff]
      %v259 = vld [vmem:[#allocation8 + $0x38] sm:$0xff]
      %v260 = vld [vmem:[#allocation8 + $0x40] sm:$0xff]
      %v261 = vld [vmem:[#allocation8 + $0x48] sm:$0xff]
      %v262 = vld [vmem:[#allocation8 + $0x50] sm:$0xff]
      %v263 = vld [vmem:[#allocation8 + $0x58] sm:$0xff]
      %v264 = vld [vmem:[#allocation8 + $0x60] sm:$0xff]
      %v265 = vld [vmem:[#allocation8 + $0x68] sm:$0xff]
      %v266 = vld [vmem:[#allocation8 + $0x70] sm:$0xff]
      %v267 = vld [vmem:[#allocation8 + $0x78] sm:$0xff]
      %v268 = vld [vmem:[#allocation8 + $0x80] sm:$0xff]
      %v269 = vld [vmem:[#allocation8 + $0x88] sm:$0xff]
      %v270 = vld [vmem:[#allocation8 + $0x90] sm:$0xff]
      %v271 = vld [vmem:[#allocation8 + $0x98] sm:$0xff]
      %v272 = vld [vmem:[#allocation8 + $0xa0] sm:$0xff]
      %v273 = vld [vmem:[#allocation8 + $0xa8] sm:$0xff]
      %v274 = vld [vmem:[#allocation8 + $0xb0] sm:$0xff]
      %v275 = vld [vmem:[#allocation8 + $0xb8] sm:$0xff]
      %v276 = vld [vmem:[#allocation8 + $0xc0] sm:$0xff]
      %v277 = vld [vmem:[#allocation8 + $0xc8] sm:$0xff]
      %v278 = vld [vmem:[#allocation8 + $0xd0] sm:$0xff]
      %v279 = vld [vmem:[#allocation8 + $0xd8] sm:$0xff]
      %v280 = vld [vmem:[#allocation8 + $0xe0] sm:$0xff]
      %v281 = vld [vmem:[#allocation8 + $0xe8] sm:$0xff]
      %v282 = vld [vmem:[#allocation8 + $0xf0] sm:$0xff]
      %v283 = vld [vmem:[#allocation8 + $0xf8] sm:$0xff]
      %v284 = vld [vmem:[#allocation8 + $0x100] sm:$0xff]
      %v285 = vld [vmem:[#allocation8 + $0x108] sm:$0xff]
      %v286 = vld [vmem:[#allocation8 + $0x110] sm:$0xff]
      %v287 = vld [vmem:[#allocation8 + $0x118] sm:$0xff]
      %v288 = vld [vmem:[#allocation8 + $0x120] sm:$0xff]
      %v289 = vld [vmem:[#allocation8 + $0x128] sm:$0xff]
      %v290 = vld [vmem:[#allocation8 + $0x130] sm:$0xff]
      %v291 = vld [vmem:[#allocation8 + $0x138] sm:$0xff]
      %v292 = vld [vmem:[#allocation8 + $0x140] sm:$0xff]
      %v293 = vld [vmem:[#allocation8 + $0x148] sm:$0xff]
      %v294 = vld [vmem:[#allocation8 + $0x150] sm:$0xff]
      %v295 = vld [vmem:[#allocation8 + $0x158] sm:$0xff]
      %v296 = vld [vmem:[#allocation8 + $0x160] sm:$0xff]
      %v297 = vld [vmem:[#allocation8 + $0x168] sm:$0xff]
      %v298 = vld [vmem:[#allocation8 + $0x170] sm:$0xff]
      %v299 = vld [vmem:[#allocation8 + $0x178] sm:$0xff]
      %v300 = vld [vmem:[#allocation8 + $0x180] sm:$0xff]
      %v301 = vld [vmem:[#allocation8 + $0x188] sm:$0xff]
      %v302 = vld [vmem:[#allocation8 + $0x190] sm:$0xff]
      %v303 = vld [vmem:[#allocation8 + $0x198] sm:$0xff]
      %v304 = vld [vmem:[#allocation8 + $0x1a0] sm:$0xff]
      %v305 = vld [vmem:[#allocation8 + $0x1a8] sm:$0xff]
      %v306 = vld [vmem:[#allocation8 + $0x1b0] sm:$0xff]
      %v307 = vld [vmem:[#allocation8 + $0x1b8] sm:$0xff]
      %v308 = vld [vmem:[#allocation8 + $0x1c0] sm:$0xff]
      %v309 = vld [vmem:[#allocation8 + $0x1c8] sm:$0xff]
      %v310 = vld [vmem:[#allocation8 + $0x1d0] sm:$0xff]
      %v311 = vld [vmem:[#allocation8 + $0x1d8] sm:$0xff]
      %v312 = vld [vmem:[#allocation8 + $0x1e0] sm:$0xff]
      %v313 = vld [vmem:[#allocation8 + $0x1e8] sm:$0xff]
      %v314 = vld [vmem:[#allocation8 + $0x1f0] sm:$0xff]
      %v315 = vld [vmem:[#allocation8 + $0x1f8] sm:$0xff]
      %v316 = vld [vmem:[%s4] sm:$0xf]
      %v318 = vlaneseq
      %v319 = vshrl.u32 %v318, 7
      %v320 = vsub.s32 0, %v319
      %v321 = vrot.slane %v316, %v320
      %v322 = vlaneseq
      %v323 = vshrl.u32 %v322, 7
      %v324 = vsub.s32 1, %v323
      %v325 = vrot.slane %v316, %v324
      %v326 = vlaneseq
      %v327 = vshrl.u32 %v326, 7
      %v328 = vsub.s32 2, %v327
      %v329 = vrot.slane %v316, %v328
      %v330 = vlaneseq
      %v331 = vshrl.u32 %v330, 7
      %v332 = vsub.s32 3, %v331
      %v333 = vrot.slane %v316, %v332
      %v402 = vunpack.c.l.b16 %v252
      %v403 = vunpack.c.h.b16 %v252
      %v404 = vunpack.c.l.b16 %v253
      %v405 = vunpack.c.h.b16 %v253
      %v406 = vunpack.c.l.b16 %v254
      %v407 = vunpack.c.h.b16 %v254
      %v408 = vunpack.c.l.b16 %v255
      %v409 = vunpack.c.h.b16 %v255
      %v410 = vunpack.c.l.b16 %v256
      %v411 = vunpack.c.h.b16 %v256
      %v412 = vunpack.c.l.b16 %v257
      %v413 = vunpack.c.h.b16 %v257
      %v414 = vunpack.c.l.b16 %v258
      %v415 = vunpack.c.h.b16 %v258
      %v416 = vunpack.c.l.b16 %v259
      %v417 = vunpack.c.h.b16 %v259
      %v418 = vunpack.c.l.b16 %v260
      %v419 = vunpack.c.h.b16 %v260
      %v420 = vunpack.c.l.b16 %v261
      %v421 = vunpack.c.h.b16 %v261
      %v422 = vunpack.c.l.b16 %v262
      %v423 = vunpack.c.h.b16 %v262
      %v424 = vunpack.c.l.b16 %v263
      %v425 = vunpack.c.h.b16 %v263
      %v426 = vunpack.c.l.b16 %v264
      %v427 = vunpack.c.h.b16 %v264
      %v428 = vunpack.c.l.b16 %v265
      %v429 = vunpack.c.h.b16 %v265
      %v430 = vunpack.c.l.b16 %v266
      %v431 = vunpack.c.h.b16 %v266
      %v432 = vunpack.c.l.b16 %v267
      %v433 = vunpack.c.h.b16 %v267
      %v434 = vunpack.c.l.b16 %v268
      %v435 = vunpack.c.h.b16 %v268
      %v436 = vunpack.c.l.b16 %v269
      %v437 = vunpack.c.h.b16 %v269
      %v438 = vunpack.c.l.b16 %v270
      %v439 = vunpack.c.h.b16 %v270
      %v440 = vunpack.c.l.b16 %v271
      %v441 = vunpack.c.h.b16 %v271
      %v442 = vunpack.c.l.b16 %v272
      %v443 = vunpack.c.h.b16 %v272
      %v444 = vunpack.c.l.b16 %v273
      %v445 = vunpack.c.h.b16 %v273
      %v446 = vunpack.c.l.b16 %v274
      %v447 = vunpack.c.h.b16 %v274
      %v448 = vunpack.c.l.b16 %v275
      %v449 = vunpack.c.h.b16 %v275
      %v450 = vunpack.c.l.b16 %v276
      %v451 = vunpack.c.h.b16 %v276
      %v452 = vunpack.c.l.b16 %v277
      %v453 = vunpack.c.h.b16 %v277
      %v454 = vunpack.c.l.b16 %v278
      %v455 = vunpack.c.h.b16 %v278
      %v456 = vunpack.c.l.b16 %v279
      %v457 = vunpack.c.h.b16 %v279
      %v458 = vunpack.c.l.b16 %v280
      %v459 = vunpack.c.h.b16 %v280
      %v460 = vunpack.c.l.b16 %v281
      %v461 = vunpack.c.h.b16 %v281
      %v462 = vunpack.c.l.b16 %v282
      %v463 = vunpack.c.h.b16 %v282
      %v464 = vunpack.c.l.b16 %v283
      %v465 = vunpack.c.h.b16 %v283
      %v466 = vunpack.c.l.b16 %v284
      %v467 = vunpack.c.h.b16 %v284
      %v468 = vunpack.c.l.b16 %v285
      %v469 = vunpack.c.h.b16 %v285
      %v470 = vunpack.c.l.b16 %v286
      %v471 = vunpack.c.h.b16 %v286
      %v472 = vunpack.c.l.b16 %v287
      %v473 = vunpack.c.h.b16 %v287
      %v474 = vunpack.c.l.b16 %v288
      %v475 = vunpack.c.h.b16 %v288
      %v476 = vunpack.c.l.b16 %v289
      %v477 = vunpack.c.h.b16 %v289
      %v478 = vunpack.c.l.b16 %v290
      %v479 = vunpack.c.h.b16 %v290
      %v480 = vunpack.c.l.b16 %v291
      %v481 = vunpack.c.h.b16 %v291
      %v482 = vunpack.c.l.b16 %v292
      %v483 = vunpack.c.h.b16 %v292
      %v484 = vunpack.c.l.b16 %v293
      %v485 = vunpack.c.h.b16 %v293
      %v486 = vunpack.c.l.b16 %v294
      %v487 = vunpack.c.h.b16 %v294
      %v488 = vunpack.c.l.b16 %v295
      %v489 = vunpack.c.h.b16 %v295
      %v490 = vunpack.c.l.b16 %v296
      %v491 = vunpack.c.h.b16 %v296
      %v492 = vunpack.c.l.b16 %v297
      %v493 = vunpack.c.h.b16 %v297
      %v494 = vunpack.c.l.b16 %v298
      %v495 = vunpack.c.h.b16 %v298
      %v496 = vunpack.c.l.b16 %v299
      %v497 = vunpack.c.h.b16 %v299
      %v498 = vunpack.c.l.b16 %v300
      %v499 = vunpack.c.h.b16 %v300
      %v500 = vunpack.c.l.b16 %v301
      %v501 = vunpack.c.h.b16 %v301
      %v502 = vunpack.c.l.b16 %v302
      %v503 = vunpack.c.h.b16 %v302
      %v504 = vunpack.c.l.b16 %v303
      %v505 = vunpack.c.h.b16 %v303
      %v506 = vunpack.c.l.b16 %v304
      %v507 = vunpack.c.h.b16 %v304
      %v508 = vunpack.c.l.b16 %v305
      %v509 = vunpack.c.h.b16 %v305
      %v510 = vunpack.c.l.b16 %v306
      %v511 = vunpack.c.h.b16 %v306
      %v512 = vunpack.c.l.b16 %v307
      %v513 = vunpack.c.h.b16 %v307
      %v514 = vunpack.c.l.b16 %v308
      %v515 = vunpack.c.h.b16 %v308
      %v516 = vunpack.c.l.b16 %v309
      %v517 = vunpack.c.h.b16 %v309
      %v518 = vunpack.c.l.b16 %v310
      %v519 = vunpack.c.h.b16 %v310
      %v520 = vunpack.c.l.b16 %v311
      %v521 = vunpack.c.h.b16 %v311
      %v522 = vunpack.c.l.b16 %v312
      %v523 = vunpack.c.h.b16 %v312
      %v524 = vunpack.c.l.b16 %v313
      %v525 = vunpack.c.h.b16 %v313
      %v526 = vunpack.c.l.b16 %v314
      %v527 = vunpack.c.h.b16 %v314
      %v528 = vunpack.c.l.b16 %v315
      %v529 = vunpack.c.h.b16 %v315
      %v530 = vpack.c.b16 %v406, %v402
      %v531 = vpack.c.b16 %v407, %v403
      %v532 = vpack.c.b16 %v408, %v404
      %v533 = vpack.c.b16 %v409, %v405
      %v534 = vpack.c.b16 %v414, %v410
      %v535 = vpack.c.b16 %v415, %v411
      %v536 = vpack.c.b16 %v416, %v412
      %v537 = vpack.c.b16 %v417, %v413
      %v538 = vpack.c.b16 %v422, %v418
      %v539 = vpack.c.b16 %v423, %v419
      %v540 = vpack.c.b16 %v424, %v420
      %v541 = vpack.c.b16 %v425, %v421
      %v542 = vpack.c.b16 %v430, %v426
      %v543 = vpack.c.b16 %v431, %v427
      %v544 = vpack.c.b16 %v432, %v428
      %v545 = vpack.c.b16 %v433, %v429
      %v546 = vpack.c.b16 %v438, %v434
      %v547 = vpack.c.b16 %v439, %v435
      %v548 = vpack.c.b16 %v440, %v436
      %v549 = vpack.c.b16 %v441, %v437
      %v550 = vpack.c.b16 %v446, %v442
      %v551 = vpack.c.b16 %v447, %v443
      %v552 = vpack.c.b16 %v448, %v444
      %v553 = vpack.c.b16 %v449, %v445
      %v554 = vpack.c.b16 %v454, %v450
      %v555 = vpack.c.b16 %v455, %v451
      %v556 = vpack.c.b16 %v456, %v452
      %v557 = vpack.c.b16 %v457, %v453
      %v558 = vpack.c.b16 %v462, %v458
      %v559 = vpack.c.b16 %v463, %v459
      %v560 = vpack.c.b16 %v464, %v460
      %v561 = vpack.c.b16 %v465, %v461
      %v562 = vpack.c.b16 %v470, %v466
      %v563 = vpack.c.b16 %v471, %v467
      %v564 = vpack.c.b16 %v472, %v468
      %v565 = vpack.c.b16 %v473, %v469
      %v566 = vpack.c.b16 %v478, %v474
      %v567 = vpack.c.b16 %v479, %v475
      %v568 = vpack.c.b16 %v480, %v476
      %v569 = vpack.c.b16 %v481, %v477
      %v570 = vpack.c.b16 %v486, %v482
      %v571 = vpack.c.b16 %v487, %v483
      %v572 = vpack.c.b16 %v488, %v484
      %v573 = vpack.c.b16 %v489, %v485
      %v574 = vpack.c.b16 %v494, %v490
      %v575 = vpack.c.b16 %v495, %v491
      %v576 = vpack.c.b16 %v496, %v492
      %v577 = vpack.c.b16 %v497, %v493
      %v578 = vpack.c.b16 %v502, %v498
      %v579 = vpack.c.b16 %v503, %v499
      %v580 = vpack.c.b16 %v504, %v500
      %v581 = vpack.c.b16 %v505, %v501
      %v582 = vpack.c.b16 %v510, %v506
      %v583 = vpack.c.b16 %v511, %v507
      %v584 = vpack.c.b16 %v512, %v508
      %v585 = vpack.c.b16 %v513, %v509
      %v586 = vpack.c.b16 %v518, %v514
      %v587 = vpack.c.b16 %v519, %v515
      %v588 = vpack.c.b16 %v520, %v516
      %v589 = vpack.c.b16 %v521, %v517
      %v590 = vpack.c.b16 %v526, %v522
      %v591 = vpack.c.b16 %v527, %v523
      %v592 = vpack.c.b16 %v528, %v524
      %v593 = vpack.c.b16 %v529, %v525
      %658 = vmatprep.subr.bf16.mxu0 %v559
      %659 = vmatpush1.bf16.msra.mxu0 %v558
      %660 = vmatprep.subr.bf16.mxu0 %v555
      %661 = vmatpush1.bf16.msra.mxu0 %v554
      %662 = vmatprep.subr.bf16.mxu0 %v551
      %663 = vmatpush1.bf16.msra.mxu0 %v550
      %664 = vmatprep.subr.bf16.mxu0 %v547
      %665 = vmatpush1.bf16.msra.mxu0 %v546
      %666 = vmatprep.subr.bf16.mxu0 %v543
      %667 = vmatpush1.bf16.msra.mxu0 %v542
      %668 = vmatprep.subr.bf16.mxu0 %v539
      %669 = vmatpush1.bf16.msra.mxu0 %v538
      %670 = vmatprep.subr.bf16.mxu0 %v535
      %671 = vmatpush1.bf16.msra.mxu0 %v534
      %672 = vmatprep.subr.bf16.mxu0 %v531
      %673 = vmatpush1.bf16.msra.mxu0 %v530
      %674 = vmatprep.subr.bf16.mxu0 %v591
      %675 = vmatpush2.bf16.msra.mxu0 %v590
      %676 = vmatprep.subr.bf16.mxu0 %v587
      %677 = vmatpush2.bf16.msra.mxu0 %v586
      %678 = vmatprep.subr.bf16.mxu0 %v583
      %679 = vmatpush2.bf16.msra.mxu0 %v582
      %680 = vmatprep.subr.bf16.mxu0 %v579
      %681 = vmatpush2.bf16.msra.mxu0 %v578
      %682 = vmatprep.subr.bf16.mxu0 %v575
      %683 = vmatpush2.bf16.msra.mxu0 %v574
      %684 = vmatprep.subr.bf16.mxu0 %v571
      %685 = vmatpush2.bf16.msra.mxu0 %v570
      %686 = vmatprep.subr.bf16.mxu0 %v567
      %687 = vmatpush2.bf16.msra.mxu0 %v566
      %688 = vmatprep.subr.bf16.mxu0 %v563
      %689 = vmatpush2.bf16.msra.mxu0 %v562
      %690 = vmatprep.mubr.bf16.mxu0 %v251
      %691 = vmatmul.mubr.bf16.gmra.mxu0 %v250
      %v692 = vpop.f32.mrf.mxu0
      %v693 = vadd.f32 %v321, %v692
      %v694 = vpop.f32.mrf.mxu0
      %v695 = vadd.f32 %v325, %v694
      %v696 = vpop.f32.mrf.mxu0
      %v697 = vadd.f32 %v321, %v696
      %v698 = vpop.f32.mrf.mxu0
      %v699 = vadd.f32 %v325, %v698
      %700 = vdwg.mxu0
      %701 = vmatprep.subr.bf16.mxu0 %v561
      %702 = vmatpush1.bf16.msra.mxu0 %v560
      %703 = vmatprep.subr.bf16.mxu0 %v557
      %704 = vmatpush1.bf16.msra.mxu0 %v556
      %705 = vmatprep.subr.bf16.mxu0 %v553
      %706 = vmatpush1.bf16.msra.mxu0 %v552
      %707 = vmatprep.subr.bf16.mxu0 %v549
      %708 = vmatpush1.bf16.msra.mxu0 %v548
      %709 = vmatprep.subr.bf16.mxu0 %v545
      %710 = vmatpush1.bf16.msra.mxu0 %v544
      %711 = vmatprep.subr.bf16.mxu0 %v541
      %712 = vmatpush1.bf16.msra.mxu0 %v540
      %713 = vmatprep.subr.bf16.mxu0 %v537
      %714 = vmatpush1.bf16.msra.mxu0 %v536
      %715 = vmatprep.subr.bf16.mxu0 %v533
      %716 = vmatpush1.bf16.msra.mxu0 %v532
      %717 = vmatprep.subr.bf16.mxu0 %v593
      %718 = vmatpush2.bf16.msra.mxu0 %v592
      %719 = vmatprep.subr.bf16.mxu0 %v589
      %720 = vmatpush2.bf16.msra.mxu0 %v588
      %721 = vmatprep.subr.bf16.mxu0 %v585
      %722 = vmatpush2.bf16.msra.mxu0 %v584
      %723 = vmatprep.subr.bf16.mxu0 %v581
      %724 = vmatpush2.bf16.msra.mxu0 %v580
      %725 = vmatprep.subr.bf16.mxu0 %v577
      %726 = vmatpush2.bf16.msra.mxu0 %v576
      %727 = vmatprep.subr.bf16.mxu0 %v573
      %728 = vmatpush2.bf16.msra.mxu0 %v572
      %729 = vmatprep.subr.bf16.mxu0 %v569
      %730 = vmatpush2.bf16.msra.mxu0 %v568
      %731 = vmatprep.subr.bf16.mxu0 %v565
      %732 = vmatpush2.bf16.msra.mxu0 %v564
      %733 = vmatprep.mubr.bf16.mxu0 %v251
      %734 = vmatmul.mubr.bf16.gmra.mxu0 %v250
      %v735 = vpop.f32.mrf.mxu0
      %v736 = vadd.f32 %v329, %v735
      %v737 = vpop.f32.mrf.mxu0
      %v738 = vadd.f32 %v333, %v737
      %v739 = vpop.f32.mrf.mxu0
      %v740 = vadd.f32 %v329, %v739
      %v741 = vpop.f32.mrf.mxu0
      %v742 = vadd.f32 %v333, %v741
      %743 = vdwg.mxu0
      %v744 = vmax.f32 %v693, 0.0
      %v745 = vmax.f32 %v695, 0.0
      %v746 = vmax.f32 %v736, 0.0
      %v747 = vmax.f32 %v738, 0.0
      %v748 = vmax.f32 %v697, 0.0
      %v749 = vmax.f32 %v699, 0.0
      %v750 = vmax.f32 %v740, 0.0
      %v751 = vmax.f32 %v742, 0.0
      %v752 = vpack.c.bf16 %v748, %v744
      %v753 = vpack.c.bf16 %v749, %v745
      %v754 = vpack.c.bf16 %v750, %v746
      %v755 = vpack.c.bf16 %v751, %v747
      %v760 = vunpack.c.l.b16 %v752
      %v761 = vunpack.c.l.b16 %v753
      %v762 = vunpack.c.l.b16 %v754
      %v763 = vunpack.c.l.b16 %v755
      %v764 = vunpack.c.h.b16 %v752
      %v765 = vunpack.c.h.b16 %v753
      %v766 = vunpack.c.h.b16 %v754
      %v767 = vunpack.c.h.b16 %v755
      %v768 = vpack.c.b16 %v761, %v760
      %v769 = vpack.c.b16 %v763, %v762
      %v770 = vpack.c.b16 %v765, %v764
      %v771 = vpack.c.b16 %v767, %v766
      %776 = vst [vmem:[#allocation2] sm:$0xff] %v768
      %777 = vst [vmem:[#allocation2 + $0x8] sm:$0xff] %v769
      %778 = vst [vmem:[#allocation2 + $0x10] sm:$0xff] %v770
      %779 = vst [vmem:[#allocation2 + $0x18] sm:$0xff] %v771
    $region49: #{tpu_custom_call.1} parent=1 // pred_fallthru
      _
    %v780 = vld [vmem:[#allocation2] sm:$0xff]
    %v781 = vld [vmem:[#allocation2 + $0x8] sm:$0xff]
    %v782 = vld [vmem:[#allocation2 + $0x10] sm:$0xff]
    %v783 = vld [vmem:[#allocation2 + $0x18] sm:$0xff]
    %v784 = vld [vmem:[#allocation9] sm:$0xf]
    %v785 = vld [vmem:[#allocation9 + $0x4] sm:$0xf]
    %v786 = vld [vmem:[#allocation9 + $0x8] sm:$0xf]
    %v787 = vld [vmem:[#allocation9 + $0xc] sm:$0xf]
    %v788 = vld [vmem:[#allocation9 + $0x10] sm:$0xf]
    %v789 = vld [vmem:[#allocation9 + $0x14] sm:$0xf]
    %v790 = vld [vmem:[#allocation9 + $0x18] sm:$0xf]
    %v791 = vld [vmem:[#allocation9 + $0x1c] sm:$0xf]
    %v792 = vld [vmem:[#allocation9 + $0x20] sm:$0xf]
    %v793 = vld [vmem:[#allocation9 + $0x24] sm:$0xf]
    %v794 = vld [vmem:[#allocation9 + $0x28] sm:$0xf]
    %v795 = vld [vmem:[#allocation9 + $0x2c] sm:$0xf]
    %v796 = vld [vmem:[#allocation9 + $0x30] sm:$0xf]
    %v797 = vld [vmem:[#allocation9 + $0x34] sm:$0xf]
    %v798 = vld [vmem:[#allocation9 + $0x38] sm:$0xf]
    %v799 = vld [vmem:[#allocation9 + $0x3c] sm:$0xf]
    %v800 = vld [vmem:[#allocation9 + $0x40] sm:$0xf]
    %v801 = vld [vmem:[#allocation9 + $0x44] sm:$0xf]
    %v802 = vld [vmem:[#allocation9 + $0x48] sm:$0xf]
    %v803 = vld [vmem:[#allocation9 + $0x4c] sm:$0xf]
    %v804 = vld [vmem:[#allocation9 + $0x50] sm:$0xf]
    %v805 = vld [vmem:[#allocation9 + $0x54] sm:$0xf]
    %v806 = vld [vmem:[#allocation9 + $0x58] sm:$0xf]
    %v807 = vld [vmem:[#allocation9 + $0x5c] sm:$0xf]
    %v808 = vld [vmem:[#allocation9 + $0x60] sm:$0xf]
    %v809 = vld [vmem:[#allocation9 + $0x64] sm:$0xf]
    %v810 = vld [vmem:[#allocation9 + $0x68] sm:$0xf]
    %v811 = vld [vmem:[#allocation9 + $0x6c] sm:$0xf]
    %v812 = vld [vmem:[#allocation9 + $0x70] sm:$0xf]
    %v813 = vld [vmem:[#allocation9 + $0x74] sm:$0xf]
    %v814 = vld [vmem:[#allocation9 + $0x78] sm:$0xf]
    %v815 = vld [vmem:[#allocation9 + $0x7c] sm:$0xf]
    %v816 = vld [vmem:[#allocation9 + $0x80] sm:$0xf]
    %v817 = vld [vmem:[#allocation9 + $0x84] sm:$0xf]
    %v818 = vld [vmem:[#allocation9 + $0x88] sm:$0xf]
    %v819 = vld [vmem:[#allocation9 + $0x8c] sm:$0xf]
    %v820 = vld [vmem:[#allocation9 + $0x90] sm:$0xf]
    %v821 = vld [vmem:[#allocation9 + $0x94] sm:$0xf]
    %v822 = vld [vmem:[#allocation9 + $0x98] sm:$0xf]
    %v823 = vld [vmem:[#allocation9 + $0x9c] sm:$0xf]
    %v824 = vld [vmem:[#allocation9 + $0xa0] sm:$0xf]
    %v825 = vld [vmem:[#allocation9 + $0xa4] sm:$0xf]
    %v826 = vld [vmem:[#allocation9 + $0xa8] sm:$0xf]
    %v827 = vld [vmem:[#allocation9 + $0xac] sm:$0xf]
    %v828 = vld [vmem:[#allocation9 + $0xb0] sm:$0xf]
    %v829 = vld [vmem:[#allocation9 + $0xb4] sm:$0xf]
    %v830 = vld [vmem:[#allocation9 + $0xb8] sm:$0xf]
    %v831 = vld [vmem:[#allocation9 + $0xbc] sm:$0xf]
    %v832 = vld [vmem:[#allocation9 + $0xc0] sm:$0xf]
    %v833 = vld [vmem:[#allocation9 + $0xc4] sm:$0xf]
    %v834 = vld [vmem:[#allocation9 + $0xc8] sm:$0xf]
    %v835 = vld [vmem:[#allocation9 + $0xcc] sm:$0xf]
    %v836 = vld [vmem:[#allocation9 + $0xd0] sm:$0xf]
    %v837 = vld [vmem:[#allocation9 + $0xd4] sm:$0xf]
    %v838 = vld [vmem:[#allocation9 + $0xd8] sm:$0xf]
    %v839 = vld [vmem:[#allocation9 + $0xdc] sm:$0xf]
    %v840 = vld [vmem:[#allocation9 + $0xe0] sm:$0xf]
    %v841 = vld [vmem:[#allocation9 + $0xe4] sm:$0xf]
    %v842 = vld [vmem:[#allocation9 + $0xe8] sm:$0xf]
    %v843 = vld [vmem:[#allocation9 + $0xec] sm:$0xf]
    %v844 = vld [vmem:[#allocation9 + $0xf0] sm:$0xf]
    %v845 = vld [vmem:[#allocation9 + $0xf4] sm:$0xf]
    %v846 = vld [vmem:[#allocation9 + $0xf8] sm:$0xf]
    %v847 = vld [vmem:[#allocation9 + $0xfc] sm:$0xf]
    %v848 = vld [vmem:[%s6] sm:$0x1]
    %v850 = vlaneseq
    %v851 = vshrl.u32 %v850, 7
    %v852 = vsub.s32 0, %v851
    %v853 = vrot.slane %v848, %v852
    %v859 = vunpack.c.l.b16 %v780
    %v860 = vunpack.c.h.b16 %v780
    %v861 = vunpack.c.l.b16 %v781
    %v862 = vunpack.c.h.b16 %v781
    %v863 = vunpack.c.l.b16 %v782
    %v864 = vunpack.c.h.b16 %v782
    %v865 = vunpack.c.l.b16 %v783
    %v866 = vunpack.c.h.b16 %v783
    %v867 = vpack.c.b16 %v863, %v859
    %v868 = vpack.c.b16 %v864, %v860
    %v869 = vpack.c.b16 %v865, %v861
    %v870 = vpack.c.b16 %v866, %v862
    %v939 = vunpack.c.l.b16 %v784
    %v940 = vunpack.c.l.b16 %v785
    %v941 = vunpack.c.l.b16 %v786
    %v942 = vunpack.c.l.b16 %v787
    %v943 = vunpack.c.l.b16 %v788
    %v944 = vunpack.c.l.b16 %v789
    %v945 = vunpack.c.l.b16 %v790
    %v946 = vunpack.c.l.b16 %v791
    %v947 = vunpack.c.l.b16 %v792
    %v948 = vunpack.c.l.b16 %v793
    %v949 = vunpack.c.l.b16 %v794
    %v950 = vunpack.c.l.b16 %v795
    %v951 = vunpack.c.l.b16 %v796
    %v952 = vunpack.c.l.b16 %v797
    %v953 = vunpack.c.l.b16 %v798
    %v954 = vunpack.c.l.b16 %v799
    %v955 = vunpack.c.l.b16 %v800
    %v956 = vunpack.c.l.b16 %v801
    %v957 = vunpack.c.l.b16 %v802
    %v958 = vunpack.c.l.b16 %v803
    %v959 = vunpack.c.l.b16 %v804
    %v960 = vunpack.c.l.b16 %v805
    %v961 = vunpack.c.l.b16 %v806
    %v962 = vunpack.c.l.b16 %v807
    %v963 = vunpack.c.l.b16 %v808
    %v964 = vunpack.c.l.b16 %v809
    %v965 = vunpack.c.l.b16 %v810
    %v966 = vunpack.c.l.b16 %v811
    %v967 = vunpack.c.l.b16 %v812
    %v968 = vunpack.c.l.b16 %v813
    %v969 = vunpack.c.l.b16 %v814
    %v970 = vunpack.c.l.b16 %v815
    %v971 = vunpack.c.l.b16 %v816
    %v972 = vunpack.c.l.b16 %v817
    %v973 = vunpack.c.l.b16 %v818
    %v974 = vunpack.c.l.b16 %v819
    %v975 = vunpack.c.l.b16 %v820
    %v976 = vunpack.c.l.b16 %v821
    %v977 = vunpack.c.l.b16 %v822
    %v978 = vunpack.c.l.b16 %v823
    %v979 = vunpack.c.l.b16 %v824
    %v980 = vunpack.c.l.b16 %v825
    %v981 = vunpack.c.l.b16 %v826
    %v982 = vunpack.c.l.b16 %v827
    %v983 = vunpack.c.l.b16 %v828
    %v984 = vunpack.c.l.b16 %v829
    %v985 = vunpack.c.l.b16 %v830
    %v986 = vunpack.c.l.b16 %v831
    %v987 = vunpack.c.l.b16 %v832
    %v988 = vunpack.c.l.b16 %v833
    %v989 = vunpack.c.l.b16 %v834
    %v990 = vunpack.c.l.b16 %v835
    %v991 = vunpack.c.l.b16 %v836
    %v992 = vunpack.c.l.b16 %v837
    %v993 = vunpack.c.l.b16 %v838
    %v994 = vunpack.c.l.b16 %v839
    %v995 = vunpack.c.l.b16 %v840
    %v996 = vunpack.c.l.b16 %v841
    %v997 = vunpack.c.l.b16 %v842
    %v998 = vunpack.c.l.b16 %v843
    %v999 = vunpack.c.l.b16 %v844
    %v1000 = vunpack.c.l.b16 %v845
    %v1001 = vunpack.c.l.b16 %v846
    %v1002 = vunpack.c.l.b16 %v847
    %v1003 = vpack.c.b16 %v940, %v939
    %v1004 = vpack.c.b16 %v942, %v941
    %v1005 = vpack.c.b16 %v944, %v943
    %v1006 = vpack.c.b16 %v946, %v945
    %v1007 = vpack.c.b16 %v948, %v947
    %v1008 = vpack.c.b16 %v950, %v949
    %v1009 = vpack.c.b16 %v952, %v951
    %v1010 = vpack.c.b16 %v954, %v953
    %v1011 = vpack.c.b16 %v956, %v955
    %v1012 = vpack.c.b16 %v958, %v957
    %v1013 = vpack.c.b16 %v960, %v959
    %v1014 = vpack.c.b16 %v962, %v961
    %v1015 = vpack.c.b16 %v964, %v963
    %v1016 = vpack.c.b16 %v966, %v965
    %v1017 = vpack.c.b16 %v968, %v967
    %v1018 = vpack.c.b16 %v970, %v969
    %v1019 = vpack.c.b16 %v972, %v971
    %v1020 = vpack.c.b16 %v974, %v973
    %v1021 = vpack.c.b16 %v976, %v975
    %v1022 = vpack.c.b16 %v978, %v977
    %v1023 = vpack.c.b16 %v980, %v979
    %v1024 = vpack.c.b16 %v982, %v981
    %v1025 = vpack.c.b16 %v984, %v983
    %v1026 = vpack.c.b16 %v986, %v985
    %v1027 = vpack.c.b16 %v988, %v987
    %v1028 = vpack.c.b16 %v990, %v989
    %v1029 = vpack.c.b16 %v992, %v991
    %v1030 = vpack.c.b16 %v994, %v993
    %v1031 = vpack.c.b16 %v996, %v995
    %v1032 = vpack.c.b16 %v998, %v997
    %v1033 = vpack.c.b16 %v1000, %v999
    %v1034 = vpack.c.b16 %v1002, %v1001
    %1067 = vmatprep.subr.bf16.mxu0 0
    %1068 = vmatpush1.bf16.msra.mxu0 %v1010
    %1069 = vmatprep.subr.bf16.mxu0 0
    %1070 = vmatpush1.bf16.msra.mxu0 %v1009
    %1071 = vmatprep.subr.bf16.mxu0 0
    %1072 = vmatpush1.bf16.msra.mxu0 %v1008
    %1073 = vmatprep.subr.bf16.mxu0 0
    %1074 = vmatpush1.bf16.msra.mxu0 %v1007
    %1075 = vmatprep.subr.bf16.mxu0 0
    %1076 = vmatpush1.bf16.msra.mxu0 %v1006
    %1077 = vmatprep.subr.bf16.mxu0 0
    %1078 = vmatpush1.bf16.msra.mxu0 %v1005
    %1079 = vmatprep.subr.bf16.mxu0 0
    %1080 = vmatpush1.bf16.msra.mxu0 %v1004
    %1081 = vmatprep.subr.bf16.mxu0 0
    %1082 = vmatpush1.bf16.msra.mxu0 %v1003
    %1083 = vmatprep.subr.bf16.mxu0 0
    %1084 = vmatpush2.bf16.msra.mxu0 %v1018
    %1085 = vmatprep.subr.bf16.mxu0 0
    %1086 = vmatpush2.bf16.msra.mxu0 %v1017
    %1087 = vmatprep.subr.bf16.mxu0 0
    %1088 = vmatpush2.bf16.msra.mxu0 %v1016
    %1089 = vmatprep.subr.bf16.mxu0 0
    %1090 = vmatpush2.bf16.msra.mxu0 %v1015
    %1091 = vmatprep.subr.bf16.mxu0 0
    %1092 = vmatpush2.bf16.msra.mxu0 %v1014
    %1093 = vmatprep.subr.bf16.mxu0 0
    %1094 = vmatpush2.bf16.msra.mxu0 %v1013
    %1095 = vmatprep.subr.bf16.mxu0 0
    %1096 = vmatpush2.bf16.msra.mxu0 %v1012
    %1097 = vmatprep.subr.bf16.mxu0 0
    %1098 = vmatpush2.bf16.msra.mxu0 %v1011
    %1099 = vmatprep.mubr.bf16.mxu0 %v868
    %1100 = vmatmul.mubr.bf16.gmra.mxu0 %v867
    %v1101 = vpop.f32.mrf.mxu0
    %v1102 = vadd.f32 %v853, %v1101
    %v1103 = vpop.f32.mrf.mxu0
    %v1104 = vpop.f32.mrf.mxu0
    %v1105 = vadd.f32 %v853, %v1104
    %v1106 = vpop.f32.mrf.mxu0
    %1107 = vdwg.mxu0
    %1108 = vmatprep.subr.bf16.mxu0 0
    %1109 = vmatpush1.bf16.msra.mxu0 %v1026
    %1110 = vmatprep.subr.bf16.mxu0 0
    %1111 = vmatpush1.bf16.msra.mxu0 %v1025
    %1112 = vmatprep.subr.bf16.mxu0 0
    %1113 = vmatpush1.bf16.msra.mxu0 %v1024
    %1114 = vmatprep.subr.bf16.mxu0 0
    %1115 = vmatpush1.bf16.msra.mxu0 %v1023
    %1116 = vmatprep.subr.bf16.mxu0 0
    %1117 = vmatpush1.bf16.msra.mxu0 %v1022
    %1118 = vmatprep.subr.bf16.mxu0 0
    %1119 = vmatpush1.bf16.msra.mxu0 %v1021
    %1120 = vmatprep.subr.bf16.mxu0 0
    %1121 = vmatpush1.bf16.msra.mxu0 %v1020
    %1122 = vmatprep.subr.bf16.mxu0 0
    %1123 = vmatpush1.bf16.msra.mxu0 %v1019
    %1124 = vmatprep.subr.bf16.mxu0 0
    %1125 = vmatpush2.bf16.msra.mxu0 %v1034
    %1126 = vmatprep.subr.bf16.mxu0 0
    %1127 = vmatpush2.bf16.msra.mxu0 %v1033
    %1128 = vmatprep.subr.bf16.mxu0 0
    %1129 = vmatpush2.bf16.msra.mxu0 %v1032
    %1130 = vmatprep.subr.bf16.mxu0 0
    %1131 = vmatpush2.bf16.msra.mxu0 %v1031
    %1132 = vmatprep.subr.bf16.mxu0 0
    %1133 = vmatpush2.bf16.msra.mxu0 %v1030
    %1134 = vmatprep.subr.bf16.mxu0 0
    %1135 = vmatpush2.bf16.msra.mxu0 %v1029
    %1136 = vmatprep.subr.bf16.mxu0 0
    %1137 = vmatpush2.bf16.msra.mxu0 %v1028
    %1138 = vmatprep.subr.bf16.mxu0 0
    %1139 = vmatpush2.bf16.msra.mxu0 %v1027
    %1140 = vmatprep.mubr.bf16.mxu0 %v870
    %1141 = vmatmul.mubr.bf16.gmra.mxu0 %v869
    %v1142 = vpop.f32.mrf.mxu0
    %v1143 = vadd.f32 %v1102, %v1142
    %v1144 = vpop.f32.mrf.mxu0
    %v1145 = vpop.f32.mrf.mxu0
    %v1146 = vadd.f32 %v1105, %v1145
    %v1147 = vpop.f32.mrf.mxu0
    %1148 = vdwg.mxu0
    %1149 = vst [vmem:[#allocation11] sm:$0xff] %v1143
    %1150 = vst [vmem:[#allocation11 + $0x8] sm:$0xff] %v1146
    // Predicated region
    $region50: #{tpu_custom_call.1} parent=1 // pred_check
      _
    $region51: #{tpu_custom_call.1} parent=1 // pred_check_branch
      %1152 = sbr.rel (0) target = $region53
    $region52: #{tpu_custom_call.1} parent=1 // pred_region
      %s1154 = ssub.s32 256, 256
      %1155 = vsyncadd [#allocation5], %s1154
      %s1156 = sshll.u32 [#allocation11], 4
      %s1157 = int_to_ptr.vmem [resolvable:$true] %s1156
      %1162 = dma.vmem_to_hbm [thread:$0]  %s1157, 256, %s7, [#allocation5], 128, 128, 8
    $region53: #{tpu_custom_call.1} parent=1 // pred_fallthru
      _
    // Predicated region
    $region54: #{tpu_custom_call.1} parent=1 // pred_check
      _
    $region55: #{tpu_custom_call.1} parent=1 // pred_check_branch
      %1164 = sbr.rel (0) target = $region57
    $region56: #{tpu_custom_call.1} parent=1 // pred_region
      %1165 = dma.done [#allocation5], 256
    $region57: #{tpu_custom_call.1} parent=1 // pred_fallthru
      _
    %1166 = vsyncpa [#allocation4], 1
    %1167 = vsyncpa [#allocation7], 1
    %1168 = vsyncpa [#allocation10], 1
    %1169 = vsyncpa [#allocation5], 1

</llo_original>
